<compile_context>
chip_gen: v7x
topology: tpu7x:2x2x1
jax: 0.10.0
libtpu: 0.0.40
codegen_flags: <defaults>
</compile_context>

<pallas_src>
import math
import functools

import numpy as np
import jax
import jax.numpy as jnp
from jax import lax
from jax.experimental import pallas as pl
from jax.experimental.pallas import tpu as pltpu

NEG_INF = -1e30


def _vmem_limit_bytes():
    """Generation-aware scoped-VMEM limit (3/4 of physical, <=96 MiB)."""
    try:
        cap = int(pltpu.get_tpu_info().vmem_capacity_bytes)
        return min((cap * 3) // 4, 96 * 1024 * 1024)
    except Exception:
        return 32 * 1024 * 1024  # safe everywhere (v7x has 64 MiB physical)


VMEM_LIMIT = _vmem_limit_bytes()


def _tile(dim, cap, align):
    """Largest `align`-aligned divisor of `dim` that is <= cap (or full dim).

    Falling back to the full dim is always layout-legal (full-extent blocks are
    exempt from the (8,128) rule); it only costs VMEM for pathological sizes.
    """
    if dim <= cap:
        return dim
    t = (cap // align) * align
    while t >= align:
        if dim % t == 0:
            return t
        t -= align
    return dim


# --------------------------- tiled matmul kernel ----------------------------

def _matmul_kernel(x_ref, w_ref, o_ref, acc_ref):
    @pl.when(pl.program_id(2) == 0)
    def _():
        acc_ref[...] = jnp.zeros(acc_ref.shape, acc_ref.dtype)

    acc_ref[...] += jnp.dot(x_ref[...], w_ref[...],
                            preferred_element_type=jnp.float32)

    @pl.when(pl.program_id(2) == pl.num_programs(2) - 1)
    def _():
        o_ref[...] = acc_ref[...].astype(o_ref.dtype)


def tiled_matmul(x, w, out_dtype, *, tm_cap=512, tn_cap=512, tk_cap=1024):
    M, K = x.shape
    K2, N = w.shape
    assert K == K2
    tm = _tile(M, tm_cap, 8)
    tn = _tile(N, tn_cap, 128)
    tk = _tile(K, tk_cap, 128)
    grid = (M // tm, N // tn, K // tk)
    return pl.pallas_call(
        _matmul_kernel,
        grid=grid,
        in_specs=[pl.BlockSpec((tm, tk), lambda i, j, k: (i, k)),
                  pl.BlockSpec((tk, tn), lambda i, j, k: (k, j))],
        out_specs=pl.BlockSpec((tm, tn), lambda i, j, k: (i, j)),
        out_shape=jax.ShapeDtypeStruct((M, N), out_dtype),
        scratch_shapes=[pltpu.VMEM((tm, tn), jnp.float32)],
        compiler_params=pltpu.CompilerParams(
            dimension_semantics=("parallel", "parallel", "arbitrary"),
            vmem_limit_bytes=VMEM_LIMIT),
    )(x, w)


# ------------------------------ RoPE kernel ---------------------------------
# One pass over the fused QKV activation: applies RoPE (f32 math) to the Q and
# K columns only, folds 1/sqrt(d) into Q, and emits head-major bf16 tensors so
# the attention kernel can load a whole GQA group as (groups*block_q, D).

def _rope_kernel(q_ref, k_ref, cos_ref, sin_ref, qo_ref, ko_ref,
                 *, head_dim, num_heads, num_kv_heads):
    half = head_dim // 2
    scale = 1.0 / math.sqrt(head_dim)
    # rotate_half(x) == pltpu.roll(x, half) * sign, sign = [-1]*half + [+1]*half
    sign = jnp.where(lax.broadcasted_iota(jnp.int32, (1, head_dim), 1) < half,
                     jnp.float32(-1.0), jnp.float32(1.0))
    cos = cos_ref[0]  # (block_s, D) f32
    sin = sin_ref[0]

    def rope(x):  # (block_s, D) f32
        return x * cos + pltpu.roll(x, half, axis=1) * sign * sin

    for h in range(num_heads):
        xh = q_ref[0, :, h * head_dim:(h + 1) * head_dim].astype(jnp.float32)
        qo_ref[0, h] = (rope(xh) * scale).astype(qo_ref.dtype)
    for h in range(num_kv_heads):
        xh = k_ref[0, :, h * head_dim:(h + 1) * head_dim].astype(jnp.float32)
        ko_ref[0, h] = rope(xh).astype(ko_ref.dtype)


def rope_qk(qkv, cos, sin, *, num_heads, num_kv_heads, head_dim, block_s=None):
    """qkv: (B, S, nH*D + 2*nKV*D) bf16; cos/sin: (B, S, D) f32.

    Returns q_rot: (B, nH, S, D) bf16 (pre-scaled), k_rot: (B, nKV, S, D) bf16.
    """
    B, S, _ = qkv.shape
    groups = num_heads // num_kv_heads
    nqd = num_heads * head_dim
    nkd = num_kv_heads * head_dim
    if block_s is None:
        block_s = _tile(S, 256, 8)
    assert S % block_s == 0
    grid = (B, S // block_s)
    kernel = functools.partial(_rope_kernel, head_dim=head_dim,
                               num_heads=num_heads, num_kv_heads=num_kv_heads)
    return pl.pallas_call(
        kernel,
        grid=grid,
        in_specs=[
            # q columns [0, nqd) of qkv
            pl.BlockSpec((1, block_s, nqd), lambda b, si: (b, si, 0)),
            # k columns [nqd, nqd+nkd) of qkv  (block index `groups` * nkd = nqd)
            pl.BlockSpec((1, block_s, nkd), lambda b, si: (b, si, groups)),
            pl.BlockSpec((1, block_s, head_dim), lambda b, si: (b, si, 0)),   # cos
            pl.BlockSpec((1, block_s, head_dim), lambda b, si: (b, si, 0)),   # sin
        ],
        out_specs=[
            pl.BlockSpec((1, num_heads, block_s, head_dim),
                         lambda b, si: (b, 0, si, 0)),
            pl.BlockSpec((1, num_kv_heads, block_s, head_dim),
                         lambda b, si: (b, 0, si, 0)),
        ],
        out_shape=(jax.ShapeDtypeStruct((B, num_heads, S, head_dim), jnp.bfloat16),
                   jax.ShapeDtypeStruct((B, num_kv_heads, S, head_dim), jnp.bfloat16)),
        compiler_params=pltpu.CompilerParams(
            dimension_semantics=("parallel", "parallel"),
            vmem_limit_bytes=VMEM_LIMIT),
    )(qkv, qkv, cos, sin)


# ----------------------- flash attention (GQA) kernel -----------------------

def _flash_attn_kernel(q_ref, k_ref, v_ref, o_ref, m_sc, l_sc, acc_sc,
                       *, head_dim, groups, block_q, block_kv):
    kv_i = pl.program_id(3)
    q_off = pl.program_id(2) * block_q
    kv_off = kv_i * block_kv
    rows = groups * block_q

    @pl.when(kv_i == 0)
    def _init():
        m_sc[...] = jnp.full(m_sc.shape, NEG_INF, m_sc.dtype)
        l_sc[...] = jnp.zeros(l_sc.shape, l_sc.dtype)
        acc_sc[...] = jnp.zeros(acc_sc.shape, acc_sc.dtype)

    # Whole GQA group stacked along M: (groups*block_q, D). The leading dims
    # of the tile collapse contiguously (block_q is a multiple of 8).
    q = q_ref[...].reshape(rows, head_dim)        # bf16 (already RoPE'd+scaled)
    k_blk = k_ref[...].reshape(block_kv, head_dim)  # bf16 (already RoPE'd)
    v_blk = v_ref[...].reshape(block_kv, head_dim)  # bf16

    def step(apply_mask):
        s = lax.dot_general(q, k_blk,
                            dimension_numbers=(((1,), (1,)), ((), ())),
                            preferred_element_type=jnp.float32)  # (rows, bkv)
        if apply_mask:
            r = lax.broadcasted_iota(jnp.int32, (rows, block_kv), 0)
            c = lax.broadcasted_iota(jnp.int32, (rows, block_kv), 1)
            q_pos = q_off + r % block_q           # row position within the q tile
            k_pos = kv_off + c
            s = jnp.where(q_pos >= k_pos, s, NEG_INF)
        m_prev = m_sc[...]
        m_new = jnp.maximum(m_prev, jnp.max(s, axis=-1, keepdims=True))
        alpha = jnp.exp(m_prev - m_new)
        p = jnp.exp(s - m_new)
        l_sc[...] = alpha * l_sc[...] + jnp.sum(p, axis=-1, keepdims=True)
        acc_sc[...] = alpha * acc_sc[...] + jnp.dot(
            p.astype(jnp.bfloat16), v_blk, preferred_element_type=jnp.float32)
        m_sc[...] = m_new

    # Fully below the diagonal: no masking needed (fast path).
    @pl.when(kv_off + block_kv <= q_off)
    def _():
        step(False)

    # Blocks crossing the diagonal: masked path.  Blocks fully above the
    # diagonal are skipped entirely (and their DMA is clamped away).
    @pl.when((kv_off + block_kv > q_off) & (kv_off <= q_off + block_q - 1))
    def _():
        step(True)

    @pl.when(kv_i == pl.num_programs(3) - 1)
    def _finalize():
        inv_l = pl.reciprocal(l_sc[...], approx=True)   # (rows, 1)
        out = acc_sc[...] * inv_l                        # (rows, D) f32
        for g in range(groups):  # lane-dense (block_q, 128) stores, once per q tile
            o_ref[0, :, g * head_dim:(g + 1) * head_dim] = (
                out[g * block_q:(g + 1) * block_q]).astype(o_ref.dtype)


def flash_attention(q_rot, k_rot, qkv, *, num_heads, num_kv_heads, head_dim,
                    block_q=None, block_kv=None, out_dtype=jnp.bfloat16):
    """q_rot: (B,nH,S,D) bf16 (RoPE'd, pre-scaled); k_rot: (B,nKV,S,D) bf16;
    qkv: fused (B,S,nH*D+2*nKV*D) activation — V is read via its index_map.
    Returns lane-dense (B, S, nH*D)."""
    B, nH, S, D = q_rot.shape
    assert nH == num_heads and D == head_dim
    groups = num_heads // num_kv_heads
    nqd = num_heads * head_dim
    nkd = num_kv_heads * head_dim
    v_col0 = (nqd + nkd) // head_dim   # first head_dim-block of V inside qkv

    if block_q is None:
        block_q = _tile(S, 256, 8)
    if block_kv is None:
        block_kv = block_q
    assert S % block_q == 0 and S % block_kv == 0

    def kv_clamp(qi, ki):
        # Last kv block that intersects the causal region of q tile `qi`;
        # clamping makes skipped (above-diagonal) steps re-reference the
        # previous block so Pallas skips the K/V DMA entirely.
        last = (qi * block_q + block_q - 1) // block_kv
        return jnp.minimum(ki, last)

    grid = (B, num_kv_heads, S // block_q, S // block_kv)
    kernel = functools.partial(_flash_attn_kernel, head_dim=head_dim,
                               groups=groups, block_q=block_q, block_kv=block_kv)
    return pl.pallas_call(
        kernel,
        grid=grid,
        in_specs=[
            pl.BlockSpec((1, groups, block_q, head_dim),
                         lambda b, h, qi, ki: (b, h, qi, 0)),          # q (whole GQA group)
            pl.BlockSpec((1, 1, block_kv, head_dim),
                         lambda b, h, qi, ki: (b, h, kv_clamp(qi, ki), 0)),   # k
            pl.BlockSpec((1, block_kv, head_dim),
                         lambda b, h, qi, ki: (b, kv_clamp(qi, ki), v_col0 + h)),  # v (from qkv)
        ],
        out_specs=pl.BlockSpec((1, block_q, groups * head_dim),
                               lambda b, h, qi, ki: (b, qi, h)),        # lane-dense out
        out_shape=jax.ShapeDtypeStruct((B, S, num_heads * head_dim), out_dtype),
        scratch_shapes=[
            pltpu.VMEM((groups * block_q, 1), jnp.float32),         # running max
            pltpu.VMEM((groups * block_q, 1), jnp.float32),         # running sum
            pltpu.VMEM((groups * block_q, head_dim), jnp.float32),  # accumulator
        ],
        compiler_params=pltpu.CompilerParams(
            dimension_semantics=("parallel", "parallel", "parallel", "arbitrary"),
            vmem_limit_bytes=VMEM_LIMIT),
    )(q_rot, k_rot, qkv)


# --------------------------------- wrapper ----------------------------------

def build_rope_cache(head_dim, max_position_embeddings, base=10000.0):
    """Emu3RotaryEmbedding cos/sin caches (no scaling variant)."""
    inv_freq = 1.0 / (base ** (jnp.arange(0, head_dim, 2, dtype=jnp.float32) / head_dim))
    t = jnp.arange(max_position_embeddings, dtype=jnp.float32)
    freqs = jnp.outer(t, inv_freq)
    emb = jnp.concatenate([freqs, freqs], axis=-1)
    return jnp.cos(emb), jnp.sin(emb)


def prepare_emu3_attention_weights(wq, wk, wv, wo):
    """Hoisted weight prep (done ONCE at model init, not per forward).
    Weights are stored (in, out) so y = x @ W  (== torch y = x @ weight.T)."""
    w_qkv = jnp.concatenate([wq, wk, wv], axis=1).astype(jnp.bfloat16)
    return w_qkv, wo.astype(jnp.bfloat16)


def emu3_attention_forward(hidden_states, position_ids, w_qkv, wo_bf16,
                           cos_cache, sin_cache,
                           *, num_heads, num_kv_heads, head_dim,
                           block_q=None, block_kv=None):
    B, S, H = hidden_states.shape
    assert num_heads % num_kv_heads == 0 and head_dim % 2 == 0
    out_dtype = hidden_states.dtype
    nqd = num_heads * head_dim
    nkd = num_kv_heads * head_dim
    assert w_qkv.shape == (H, nqd + 2 * nkd)

    # Fused q/k/v projection: one tiled bf16 MXU matmul against [Wq | Wk | Wv].
    x2d = hidden_states.reshape(B * S, H).astype(jnp.bfloat16)
    qkv = tiled_matmul(x2d, w_qkv, jnp.bfloat16).reshape(B, S, nqd + 2 * nkd)

    cos = cos_cache[position_ids].astype(jnp.float32)   # (B, S, D)
    sin = sin_cache[position_ids].astype(jnp.float32)

    # RoPE (+ 1/sqrt(d) folded into Q) applied once, outside the attention loop.
    q_rot, k_rot = rope_qk(qkv, cos, sin, num_heads=num_heads,
                           num_kv_heads=num_kv_heads, head_dim=head_dim)

    # Flash attention; V is read directly from the fused qkv activation.
    attn = flash_attention(q_rot, k_rot, qkv,
                           num_heads=num_heads, num_kv_heads=num_kv_heads,
                           head_dim=head_dim, block_q=block_q, block_kv=block_kv,
                           out_dtype=jnp.bfloat16)       # (B, S, nH*D) lane-dense

    out = tiled_matmul(attn.reshape(B * S, nqd), wo_bf16, out_dtype)
    return out.reshape(B, S, H)


# --------------------------- pure-JAX reference -----------------------------

def reference_forward(hidden_states, position_ids, wq, wk, wv, wo,
                      cos_cache, sin_cache, *, num_heads, num_kv_heads, head_dim):
    B, S, H = hidden_states.shape
    groups = num_heads // num_kv_heads
    x = hidden_states.astype(jnp.float32).reshape(B * S, H)
    q = (x @ wq).reshape(B, S, num_heads, head_dim).transpose(0, 2, 1, 3)
    k = (x @ wk).reshape(B, S, num_kv_heads, head_dim).transpose(0, 2, 1, 3)
    v = (x @ wv).reshape(B, S, num_kv_heads, head_dim).transpose(0, 2, 1, 3)
    cos = cos_cache[position_ids][:, None, :, :]
    sin = sin_cache[position_ids][:, None, :, :]

    def rotate_half(t):
        t1, t2 = t[..., :head_dim // 2], t[..., head_dim // 2:]
        return jnp.concatenate([-t2, t1], axis=-1)

    q = q * cos + rotate_half(q) * sin
    k = k * cos + rotate_half(k) * sin
    k = jnp.repeat(k, groups, axis=1)
    v = jnp.repeat(v, groups, axis=1)
    causal = jnp.tril(jnp.ones((S, S), dtype=bool))
    mask = jnp.where(causal, 0.0, jnp.finfo(jnp.float32).min)[None, None]
    scores = jnp.einsum("bhqd,bhkd->bhqk", q, k) / math.sqrt(head_dim) + mask
    p = jax.nn.softmax(scores, axis=-1)
    o = jnp.einsum("bhqk,bhkd->bhqd", p, v)
    o = o.transpose(0, 2, 1, 3).reshape(B * S, num_heads * head_dim)
    return (o @ wo).reshape(B, S, H)


# ----------------------------------- main ------------------------------------

if __name__ == "__main__":
    # Small config consistent with the module (head_dim=128 as in real Emu3).
    B, S = 2, 64
    hidden_size = 512
    num_heads = 4
    num_kv_heads = 2
    head_dim = hidden_size // num_heads          # 128
    max_position_embeddings = 128
    rope_theta = 10000.0

    key = jax.random.PRNGKey(0)
    k_x, k_q, k_k, k_v, k_o = jax.random.split(key, 5)

    hidden_states = jax.random.normal(k_x, (B, S, hidden_size), dtype=jnp.float32)
    # Linear weights stored as (in, out) so y = x @ W  (== torch y = x @ weight.T)
    wq = 0.02 * jax.random.normal(k_q, (hidden_size, num_heads * head_dim), dtype=jnp.float32)
    wk = 0.02 * jax.random.normal(k_k, (hidden_size, num_kv_heads * head_dim), dtype=jnp.float32)
    wv = 0.02 * jax.random.normal(k_v, (hidden_size, num_kv_heads * head_dim), dtype=jnp.float32)
    wo = 0.02 * jax.random.normal(k_o, (num_heads * head_dim, hidden_size), dtype=jnp.float32)

    # Hoisted out of the per-forward path (done once at "model init").
    w_qkv, wo_bf16 = prepare_emu3_attention_weights(wq, wk, wv, wo)

    cos_cache, sin_cache = build_rope_cache(head_dim, max_position_embeddings, rope_theta)
    position_ids = jnp.broadcast_to(jnp.arange(S, dtype=jnp.int32)[None, :], (B, S))

    out = emu3_attention_forward(
        hidden_states, position_ids, w_qkv, wo_bf16, cos_cache, sin_cache,
        num_heads=num_heads, num_kv_heads=num_kv_heads, head_dim=head_dim,
        block_q=16, block_kv=16)     # small blocks to exercise the flash loop,
                                     # mask/no-mask branches and DMA clamping
    out = jax.block_until_ready(out)

    ref = reference_forward(
        hidden_states, position_ids, wq, wk, wv, wo, cos_cache, sin_cache,
        num_heads=num_heads, num_kv_heads=num_kv_heads, head_dim=head_dim)

    np.testing.assert_allclose(np.asarray(out), np.asarray(ref), rtol=2e-2, atol=2e-2)
    print("KERNEL_OK")
</pallas_src>

<mosaic_0001>
module attributes {stable_mosaic.version = 11 : i64} {
  func.func @_matmul_kernel(%arg0: i32, %arg1: i32, %arg2: i32, %arg3: memref<128x512xbf16, #tpu.memory_space<vmem>>, %arg4: memref<512x512xbf16, #tpu.memory_space<vmem>>, %arg5: memref<128x512xbf16, #tpu.memory_space<vmem>>, %arg6: memref<128x512xf32, #tpu.memory_space<vmem>>) attributes {dimension_semantics = [#tpu.dimension_semantics<parallel>, #tpu.dimension_semantics<parallel>, #tpu.dimension_semantics<arbitrary>], iteration_bounds = array<i64: 1, 2, 1>, scalar_prefetch = 0 : i64, scratch_operands = 1 : i64, tpu.core_type = #tpu.core_type<tc>, window_params = [{transform_indices = @transform_0, window_bounds = array<i64: 128, 512>}, {transform_indices = @transform_1, window_bounds = array<i64: 512, 512>}, {transform_indices = @transform_2, window_bounds = array<i64: 128, 512>}]} {
    %c0_i32 = arith.constant 0 : i32
    %0 = arith.cmpi eq, %arg2, %c0_i32 : i32
    %1 = arith.extui %0 : i1 to i32
    %c0_i32_0 = arith.constant 0 : i32
    %2 = arith.cmpi ne, %1, %c0_i32_0 : i32
    scf.if %2 {
      %cst_10 = arith.constant 0.000000e+00 : f32
      %12 = vector.broadcast %cst_10 : f32 to vector<128x512xf32>
      %c0_11 = arith.constant 0 : index
      %c0_12 = arith.constant 0 : index
      %13 = vector.load %arg6[%c0_11, %c0_12] : memref<128x512xf32, #tpu.memory_space<vmem>>, vector<128x512xf32>
      tpu.vector_store %arg6[%c0_11, %c0_12], %12 {strides = array<i32>} : memref<128x512xf32, #tpu.memory_space<vmem>>, vector<128x512xf32>,
    } else {
    }
    %c0 = arith.constant 0 : index
    %c0_1 = arith.constant 0 : index
    %3 = vector.load %arg6[%c0, %c0_1] : memref<128x512xf32, #tpu.memory_space<vmem>>, vector<128x512xf32>
    %c0_2 = arith.constant 0 : index
    %c0_3 = arith.constant 0 : index
    %4 = vector.load %arg3[%c0_2, %c0_3] : memref<128x512xbf16, #tpu.memory_space<vmem>>, vector<128x512xbf16>
    %c0_4 = arith.constant 0 : index
    %c0_5 = arith.constant 0 : index
    %5 = vector.load %arg4[%c0_4, %c0_5] : memref<512x512xbf16, #tpu.memory_space<vmem>>, vector<512x512xbf16>
    %cst = arith.constant dense<0.000000e+00> : vector<128x512xf32>
    %6 = tpu.matmul %4, %5, %cst {dimension_numbers = #tpu.dot_dimension_numbers<[1], [0], [0], [1], [0, 0, 1, 1], [], []>} : vector<128x512xbf16>, vector<512x512xbf16>, vector<128x512xf32> -> vector<128x512xf32>
    %7 = arith.addf %3, %6 : vector<128x512xf32>
    %c0_6 = arith.constant 0 : index
    %c0_7 = arith.constant 0 : index
    %8 = vector.load %arg6[%c0_6, %c0_7] : memref<128x512xf32, #tpu.memory_space<vmem>>, vector<128x512xf32>
    tpu.vector_store %arg6[%c0_6, %c0_7], %7 {strides = array<i32>} : memref<128x512xf32, #tpu.memory_space<vmem>>, vector<128x512xf32>,
    %c0_i32_8 = arith.constant 0 : i32
    %9 = arith.cmpi eq, %arg2, %c0_i32_8 : i32
    %10 = arith.extui %9 : i1 to i32
    %c0_i32_9 = arith.constant 0 : i32
    %11 = arith.cmpi ne, %10, %c0_i32_9 : i32
    scf.if %11 {
      %c0_10 = arith.constant 0 : index
      %c0_11 = arith.constant 0 : index
      %12 = vector.load %arg6[%c0_10, %c0_11] : memref<128x512xf32, #tpu.memory_space<vmem>>, vector<128x512xf32>
      %13 = arith.truncf %12 : vector<128x512xf32> to vector<128x512xbf16>
      %c0_12 = arith.constant 0 : index
      %c0_13 = arith.constant 0 : index
      %14 = vector.load %arg5[%c0_12, %c0_13] : memref<128x512xbf16, #tpu.memory_space<vmem>>, vector<128x512xbf16>
      tpu.vector_store %arg5[%c0_12, %c0_13], %13 {strides = array<i32>} : memref<128x512xbf16, #tpu.memory_space<vmem>>, vector<128x512xbf16>,
    } else {
    }
    return
  }
  func.func @transform_0(%arg0: i32, %arg1: i32, %arg2: i32) -> (i32, i32) {
    %c0_i32 = arith.constant 0 : i32
    return %arg0, %arg2 : i32, i32
  }
  func.func @transform_1(%arg0: i32, %arg1: i32, %arg2: i32) -> (i32, i32) {
    %c0_i32 = arith.constant 0 : i32
    return %arg2, %arg1 : i32, i32
  }
  func.func @transform_2(%arg0: i32, %arg1: i32, %arg2: i32) -> (i32, i32) {
    %c0_i32 = arith.constant 0 : i32
    return %arg0, %arg1 : i32, i32
  }
}

</mosaic_0001>

<llo_original>
// kernel: tpu_custom_call.1
$region0: #{tpu_custom_call.1}
  #allocation0 [shape = 'u32[]', space=smem, size = 0x4, offset = 0x4, fixed_abs, tag = 'smem constant byte address 0x4 - core index']
  #allocation1 [shape = 'u32[144,128]{1,0:T(1,128)}', space=vmem, size = 0x12000, scoped, tag = 'internal scratch']
  #allocation2 [shape = 'f32[128,512]{1,0:T(8,128)}', space=vmem, size = 0x40000, scoped, tag = 'scratch operand']
  %s0 = inlined_call_operand.hbm [shape: bf16[128,512], index: 0, kind: input, shape index: {}]
  %s1 = inlined_call_operand.hbm [shape: bf16[512,1024], index: 1, kind: input, shape index: {}]
  %s2 = inlined_call_operand.hbm [shape: bf16[128,1024], index: 2, kind: output, shape index: {}]
  %s3 = sld [smem:[#allocation0]]
  $region57: #{tpu_custom_call.1} parent=0
    _
  %s5 = ssub.s32 1, %s3
  %s6 = scalar_select 0, %s5, %s3
  $region1: #{tpu_custom_call.1} parent=0
    #allocation3 [shape = 'u8[131072]{0}', space=vmem, size = 0x20000, scoped, tag = 'input window, operand 0, single buffered']
    #allocation4 [shape = 's32[2]{0}', space=sflag, size = 0x8, scoped, tag = 'scoped memory for tpu_custom_call.1']
    #allocation5 [shape = 's32[2]{0}', space=sflag, size = 0x8, scoped, tag = 'scoped memory for tpu_custom_call.1']
    #allocation6 [shape = 'u8[1048576]{0}', space=vmem, size = 0x100000, scoped, tag = 'input window, operand 1']
    #allocation7 [shape = 's32[2]{0}', space=sflag, size = 0x8, scoped, tag = 'scoped memory for tpu_custom_call.1']
    #allocation8 [shape = 'u8[262144]{0}', space=vmem, size = 0x40000, scoped, tag = 'output window, operand 0']
    %7 = vsyncpa [#allocation4], 0
    %8 = vsyncpa [#allocation7], 0
    %s9 = scalar_lea.sflag [#allocation7], 1
    %10 = vsyncpa %s9, 0
    %11 = vsyncpa [#allocation5], 0
    %s12 = scalar_lea.sflag [#allocation5], 1
    %13 = vsyncpa %s12, 0
    loop: start=0, step=1, limit=4
    $region2: #{tpu_custom_call.1} parent=1 // loop_pre_header
      _
    $region3: #{tpu_custom_call.1} parent=1 // loop_header
      %s15 = sphi 0, %s19
      %p16 = scmp.ge.s32.totalorder %s15, 4
      %s22 = sphi 0, %s41
      %s23 = sphi 0, %s37
      %s24 = sphi 0, %s33
      %s25 = sphi 0, %s22
      %s26 = sphi 0, %s23
      %s27 = sphi 0, %s24
      %s28 = sphi 0, %s25
      %s29 = sphi 0, %s26
      %s30 = sphi 0, %s27
      %s46 = sphi 0, %s48
      %s49 = sphi 0, %s46
      %s50 = sphi 0, %s49
      %s66 = sphi 0, %s50
      %s74 = sphi 0, %s76
      %s77 = sphi 0, %s74
      %s78 = sphi 0, %s77
      %s94 = sphi 0, %s78
      %s102 = sphi 0, %s104
      %s105 = sphi 0, %s102
      %s106 = sphi 0, %s105
      %s122 = sphi 0, %s106
    $region4: #{tpu_custom_call.1} parent=1 // loop_header_branch
      %18 = sbr.rel (%p16) target = $region8
    $region5: #{tpu_custom_call.1} parent=1 // loop_body
      %s20 = ssub.s32 %s15, 1
      %s21 = ssub.s32 %s15, 2
      %s31 = sadd.s32 1, %s24
      %p32 = scmp.ge.s32.totalorder %s31, 1
      %s33 = scalar_select %p32, 0, %s31
      %s34 = sadd.s32 1, %s23
      %s35 = scalar_select %p32, %s34, %s23
      %p36 = scmp.ge.s32.totalorder %s35, 2
      %s37 = scalar_select %p36, 0, %s35
      %s38 = sadd.s32 1, %s22
      %s39 = scalar_select %p36, %s38, %s22
      %p40 = scmp.ge.s32.totalorder %s39, 1
      %s41 = scalar_select %p40, 0, %s39
      %s42 = ssub.s32 %s22, %s41
      %s43 = ssub.s32 %s24, %s33
      %s44 = sor.u32 %s42, %s43
      %p45 = scmp.eq.s32.totalorder %s44, 0
      %s47 = sadd.s32 %s46, 1
      %s48 = scalar_select %p45, %s46, %s47
      %p51 = pneg %p45
      %p52 = scmp.eq.s32.totalorder %s15, 1
      %p53 = por %p51, %p52
      %p54 = scmp.ne.s32.totalorder %s46, %s49
      %p55 = scmp.eq.s32.totalorder %s15, 0
      %p56 = por %p54, %p55
      %p57 = scmp.ne.s32.totalorder %s46, %s49
      %p58 = scmp.eq.s32.totalorder %s20, 1
      %p59 = por %p57, %p58
      %p60 = scmp.ne.s32.totalorder %s49, %s50
      %p61 = scmp.eq.s32.totalorder %s20, 0
      %p62 = por %p60, %p61
      %p63 = scmp.ne.s32.totalorder %s49, %s50
      %p64 = scmp.eq.s32.totalorder %s21, 1
      %p65 = por %p63, %p64
      %p67 = scmp.ne.s32.totalorder %s50, %s66
      %p68 = scmp.eq.s32.totalorder %s21, 0
      %p69 = por %p67, %p68
      %s70 = ssub.s32 %s24, %s33
      %s71 = ssub.s32 %s23, %s37
      %s72 = sor.u32 %s70, %s71
      %p73 = scmp.eq.s32.totalorder %s72, 0
      %s75 = sadd.s32 %s74, 1
      %s76 = scalar_select %p73, %s74, %s75
      %p79 = pneg %p73
      %p80 = scmp.eq.s32.totalorder %s15, 1
      %p81 = por %p79, %p80
      %p82 = scmp.ne.s32.totalorder %s74, %s77
      %p83 = scmp.eq.s32.totalorder %s15, 0
      %p84 = por %p82, %p83
      %p85 = scmp.ne.s32.totalorder %s74, %s77
      %p86 = scmp.eq.s32.totalorder %s20, 1
      %p87 = por %p85, %p86
      %p88 = scmp.ne.s32.totalorder %s77, %s78
      %p89 = scmp.eq.s32.totalorder %s20, 0
      %p90 = por %p88, %p89
      %p91 = scmp.ne.s32.totalorder %s77, %s78
      %p92 = scmp.eq.s32.totalorder %s21, 1
      %p93 = por %p91, %p92
      %p95 = scmp.ne.s32.totalorder %s78, %s94
      %p96 = scmp.eq.s32.totalorder %s21, 0
      %p97 = por %p95, %p96
      %s98 = ssub.s32 %s22, %s41
      %s99 = ssub.s32 %s23, %s37
      %s100 = sor.u32 %s98, %s99
      %p101 = scmp.eq.s32.totalorder %s100, 0
      %s103 = sadd.s32 %s102, 1
      %s104 = scalar_select %p101, %s102, %s103
      %p107 = pneg %p101
      %p108 = scmp.eq.s32.totalorder %s15, 1
      %p109 = por %p107, %p108
      %p110 = scmp.ne.s32.totalorder %s102, %s105
      %p111 = scmp.eq.s32.totalorder %s15, 0
      %p112 = por %p110, %p111
      %p113 = scmp.ne.s32.totalorder %s102, %s105
      %p114 = scmp.eq.s32.totalorder %s20, 1
      %p115 = por %p113, %p114
      %p116 = scmp.ne.s32.totalorder %s105, %s106
      %p117 = scmp.eq.s32.totalorder %s20, 0
      %p118 = por %p116, %p117
      %p119 = scmp.ne.s32.totalorder %s105, %s106
      %p120 = scmp.eq.s32.totalorder %s21, 1
      %p121 = por %p119, %p120
      %p123 = scmp.ne.s32.totalorder %s106, %s122
      %p124 = scmp.eq.s32.totalorder %s21, 0
      %p125 = por %p123, %p124
      %p126 = scmp.le.s32.totalorder 1, %s15
      %p127 = scmp.lt.s32.totalorder %s15, 3
      %p128 = pnand %p126, %p127
      %p129 = pneg %p128
      // Predicated region
      $region9: #{tpu_custom_call.1} parent=5 // pred_check
        _
      $region10: #{tpu_custom_call.1} parent=5 // pred_check_branch
        %131 = sbr.rel (%p128) target = $region12
      $region11: #{tpu_custom_call.1} parent=5 // pred_region
        %s132 = ssub.s32 %s15, 1
        // Predicated region
        $region13: #{tpu_custom_call.1} parent=11 // pred_check
          %p133 = pneg %p62
        $region14: #{tpu_custom_call.1} parent=11 // pred_check_branch
          %135 = sbr.rel (%p133) target = $region16
        $region15: #{tpu_custom_call.1} parent=11 // pred_region
          %s136 = smul.u32 16, %s25
          %s137 = smul.u32 4, %s27
          %s139 = ssub.s32 4096, 4096
          %140 = vsyncadd [#allocation4], %s139
          %s141 = smul.addr %s136, 4
          %s142 = sadd.s32 %s137, %s141
          %s143 = smul.addr %s142, 64
          %s144 = scalar_lea.hbm %s0, %s143
          %s145 = sshll.u32 [#allocation3], 4
          %s146 = int_to_ptr.vmem [resolvable:$true] %s145
          %151 = dma.hbm_to_vmem [thread:$0]  %s144, 4096, %s146, [#allocation4], 256, 256, 16
        $region16: #{tpu_custom_call.1} parent=11 // pred_fallthru
          _
      $region12: #{tpu_custom_call.1} parent=5 // pred_fallthru
        _
      %p152 = scmp.lt.s32.totalorder %s15, 2
      // Predicated region
      $region17: #{tpu_custom_call.1} parent=5 // pred_check
        %p153 = pneg %p152
      $region18: #{tpu_custom_call.1} parent=5 // pred_check_branch
        %155 = sbr.rel (%p153) target = $region20
      $region19: #{tpu_custom_call.1} parent=5 // pred_region
        // Predicated region
        $region21: #{tpu_custom_call.1} parent=19 // pred_check
          %p156 = pneg %p84
        $region22: #{tpu_custom_call.1} parent=19 // pred_check_branch
          %158 = sbr.rel (%p156) target = $region24
        $region23: #{tpu_custom_call.1} parent=19 // pred_region
          %s159 = sand.u32 %s74, 1
          %s160 = scalar_lea.sflag [#allocation7], %s159
          %s161 = sand.u32 %s74, 1
          %s162 = smul.addr %s161, 1024
          %s163 = scalar_lea.vmem [#allocation6], %s162
          %s164 = smul.u32 64, %s24
          %s165 = smul.u32 4, %s23
          %s167 = ssub.s32 16384, 16384
          %168 = vsyncadd %s160, %s167
          %s169 = smul.addr %s164, 8
          %s170 = sadd.s32 %s165, %s169
          %s171 = smul.addr %s170, 64
          %s172 = scalar_lea.hbm %s1, %s171
          %s173 = sshll.u32 %s163, 4
          %s174 = int_to_ptr.vmem [resolvable:$true] %s173
          %179 = dma.hbm_to_vmem [thread:$0]  %s172, 16384, %s174, %s160, 512, 256, 16
        $region24: #{tpu_custom_call.1} parent=19 // pred_fallthru
          _
      $region20: #{tpu_custom_call.1} parent=5 // pred_fallthru
        _
      %p180 = scmp.le.s32.totalorder 1, %s15
      %p181 = scmp.lt.s32.totalorder %s15, 3
      %p182 = pnand %p180, %p181
      %p183 = pneg %p182
      // Predicated region
      $region25: #{tpu_custom_call.1} parent=5 // pred_check
        _
      $region26: #{tpu_custom_call.1} parent=5 // pred_check_branch
        %185 = sbr.rel (%p182) target = $region28
      $region27: #{tpu_custom_call.1} parent=5 // pred_region
        %s186 = ssub.s32 %s15, 1
        // Predicated region
        $region29: #{tpu_custom_call.1} parent=27 // pred_check
          %p187 = pneg %p62
        $region30: #{tpu_custom_call.1} parent=27 // pred_check_branch
          %189 = sbr.rel (%p187) target = $region32
        $region31: #{tpu_custom_call.1} parent=27 // pred_region
          %190 = dma.done [#allocation4], 4096
        $region32: #{tpu_custom_call.1} parent=27 // pred_fallthru
          _
        %s191 = sand.u32 %s77, 1
        %s192 = scalar_lea.sflag [#allocation7], %s191
        %s193 = sand.u32 %s77, 1
        %s194 = smul.addr %s193, 1024
        %s195 = scalar_lea.vmem [#allocation6], %s194
        // Predicated region
        $region33: #{tpu_custom_call.1} parent=27 // pred_check
          %p196 = pneg %p90
        $region34: #{tpu_custom_call.1} parent=27 // pred_check_branch
          %198 = sbr.rel (%p196) target = $region36
        $region35: #{tpu_custom_call.1} parent=27 // pred_region
          %199 = dma.done %s192, 16384
        $region36: #{tpu_custom_call.1} parent=27 // pred_fallthru
          _
        %p200 = pneg %p62
        %p201 = pneg %p59
        %s202 = sand.u32 %s77, 1
        %s203 = scalar_lea.sflag [#allocation7], %s202
        %s204 = sand.u32 %s77, 1
        %s205 = smul.addr %s204, 1024
        %s206 = scalar_lea.vmem [#allocation6], %s205
        %p207 = pneg %p90
        %p208 = pneg %p87
        %p209 = pneg %p118
        %p210 = pneg %p115
        %s211 = sand.u32 %s105, 1
        %s212 = scalar_lea.sflag [#allocation5], %s211
        %s213 = sand.u32 %s105, 1
        %s214 = smul.addr %s213, 256
        %s215 = scalar_lea.vmem [#allocation8], %s214
        %s216 = smul.u32 16, %s25
        %s217 = smul.u32 4, %s27
        %s218 = smul.u32 64, %s27
        %s219 = smul.u32 4, %s26
        %s220 = smul.u32 16, %s25
        %s221 = smul.u32 4, %s26
        %p222 = scmp.eq.s32.totalorder %s27, 0
        // Predicated region
        $region37: #{tpu_custom_call.1} parent=27 // pred_check
          %p223 = pneg %p222
        $region38: #{tpu_custom_call.1} parent=27 // pred_check_branch
          %225 = sbr.rel (%p223) target = $region40
        $region39: #{tpu_custom_call.1} parent=27 // pred_region
          %226 = vst [vmem:[#allocation2] sm:$0xff] 0.0
          %227 = vst [vmem:[#allocation2 + $0x8] sm:$0xff] 0.0
          %228 = vst [vmem:[#allocation2 + $0x10] sm:$0xff] 0.0
          %229 = vst [vmem:[#allocation2 + $0x18] sm:$0xff] 0.0
          %230 = vst [vmem:[#allocation2 + $0x20] sm:$0xff] 0.0
          %231 = vst [vmem:[#allocation2 + $0x28] sm:$0xff] 0.0
          %232 = vst [vmem:[#allocation2 + $0x30] sm:$0xff] 0.0
          %233 = vst [vmem:[#allocation2 + $0x38] sm:$0xff] 0.0
          %234 = vst [vmem:[#allocation2 + $0x40] sm:$0xff] 0.0
          %235 = vst [vmem:[#allocation2 + $0x48] sm:$0xff] 0.0
          %236 = vst [vmem:[#allocation2 + $0x50] sm:$0xff] 0.0
          %237 = vst [vmem:[#allocation2 + $0x58] sm:$0xff] 0.0
          %238 = vst [vmem:[#allocation2 + $0x60] sm:$0xff] 0.0
          %239 = vst [vmem:[#allocation2 + $0x68] sm:$0xff] 0.0
          %240 = vst [vmem:[#allocation2 + $0x70] sm:$0xff] 0.0
          %241 = vst [vmem:[#allocation2 + $0x78] sm:$0xff] 0.0
          %242 = vst [vmem:[#allocation2 + $0x80] sm:$0xff] 0.0
          %243 = vst [vmem:[#allocation2 + $0x88] sm:$0xff] 0.0
          %244 = vst [vmem:[#allocation2 + $0x90] sm:$0xff] 0.0
          %245 = vst [vmem:[#allocation2 + $0x98] sm:$0xff] 0.0
          %246 = vst [vmem:[#allocation2 + $0xa0] sm:$0xff] 0.0
          %247 = vst [vmem:[#allocation2 + $0xa8] sm:$0xff] 0.0
          %248 = vst [vmem:[#allocation2 + $0xb0] sm:$0xff] 0.0
          %249 = vst [vmem:[#allocation2 + $0xb8] sm:$0xff] 0.0
          %250 = vst [vmem:[#allocation2 + $0xc0] sm:$0xff] 0.0
          %251 = vst [vmem:[#allocation2 + $0xc8] sm:$0xff] 0.0
          %252 = vst [vmem:[#allocation2 + $0xd0] sm:$0xff] 0.0
          %253 = vst [vmem:[#allocation2 + $0xd8] sm:$0xff] 0.0
          %254 = vst [vmem:[#allocation2 + $0xe0] sm:$0xff] 0.0
          %255 = vst [vmem:[#allocation2 + $0xe8] sm:$0xff] 0.0
          %256 = vst [vmem:[#allocation2 + $0xf0] sm:$0xff] 0.0
          %257 = vst [vmem:[#allocation2 + $0xf8] sm:$0xff] 0.0
          %258 = vst [vmem:[#allocation2 + $0x100] sm:$0xff] 0.0
          %259 = vst [vmem:[#allocation2 + $0x108] sm:$0xff] 0.0
          %260 = vst [vmem:[#allocation2 + $0x110] sm:$0xff] 0.0
          %261 = vst [vmem:[#allocation2 + $0x118] sm:$0xff] 0.0
          %262 = vst [vmem:[#allocation2 + $0x120] sm:$0xff] 0.0
          %263 = vst [vmem:[#allocation2 + $0x128] sm:$0xff] 0.0
          %264 = vst [vmem:[#allocation2 + $0x130] sm:$0xff] 0.0
          %265 = vst [vmem:[#allocation2 + $0x138] sm:$0xff] 0.0
          %266 = vst [vmem:[#allocation2 + $0x140] sm:$0xff] 0.0
          %267 = vst [vmem:[#allocation2 + $0x148] sm:$0xff] 0.0
          %268 = vst [vmem:[#allocation2 + $0x150] sm:$0xff] 0.0
          %269 = vst [vmem:[#allocation2 + $0x158] sm:$0xff] 0.0
          %270 = vst [vmem:[#allocation2 + $0x160] sm:$0xff] 0.0
          %271 = vst [vmem:[#allocation2 + $0x168] sm:$0xff] 0.0
          %272 = vst [vmem:[#allocation2 + $0x170] sm:$0xff] 0.0
          %273 = vst [vmem:[#allocation2 + $0x178] sm:$0xff] 0.0
          %274 = vst [vmem:[#allocation2 + $0x180] sm:$0xff] 0.0
          %275 = vst [vmem:[#allocation2 + $0x188] sm:$0xff] 0.0
          %276 = vst [vmem:[#allocation2 + $0x190] sm:$0xff] 0.0
          %277 = vst [vmem:[#allocation2 + $0x198] sm:$0xff] 0.0
          %278 = vst [vmem:[#allocation2 + $0x1a0] sm:$0xff] 0.0
          %279 = vst [vmem:[#allocation2 + $0x1a8] sm:$0xff] 0.0
          %280 = vst [vmem:[#allocation2 + $0x1b0] sm:$0xff] 0.0
          %281 = vst [vmem:[#allocation2 + $0x1b8] sm:$0xff] 0.0
          %282 = vst [vmem:[#allocation2 + $0x1c0] sm:$0xff] 0.0
          %283 = vst [vmem:[#allocation2 + $0x1c8] sm:$0xff] 0.0
          %284 = vst [vmem:[#allocation2 + $0x1d0] sm:$0xff] 0.0
          %285 = vst [vmem:[#allocation2 + $0x1d8] sm:$0xff] 0.0
          %286 = vst [vmem:[#allocation2 + $0x1e0] sm:$0xff] 0.0
          %287 = vst [vmem:[#allocation2 + $0x1e8] sm:$0xff] 0.0
          %288 = vst [vmem:[#allocation2 + $0x1f0] sm:$0xff] 0.0
          %289 = vst [vmem:[#allocation2 + $0x1f8] sm:$0xff] 0.0
        $region40: #{tpu_custom_call.1} parent=27 // pred_fallthru
          _
        %v290 = vld [vmem:[#allocation2] sm:$0xff]
        %v291 = vld [vmem:[#allocation2 + $0x8] sm:$0xff]
        %v292 = vld [vmem:[#allocation2 + $0x10] sm:$0xff]
        %v293 = vld [vmem:[#allocation2 + $0x18] sm:$0xff]
        %v294 = vld [vmem:[#allocation2 + $0x20] sm:$0xff]
        %v295 = vld [vmem:[#allocation2 + $0x28] sm:$0xff]
        %v296 = vld [vmem:[#allocation2 + $0x30] sm:$0xff]
        %v297 = vld [vmem:[#allocation2 + $0x38] sm:$0xff]
        %v298 = vld [vmem:[#allocation2 + $0x40] sm:$0xff]
        %v299 = vld [vmem:[#allocation2 + $0x48] sm:$0xff]
        %v300 = vld [vmem:[#allocation2 + $0x50] sm:$0xff]
        %v301 = vld [vmem:[#allocation2 + $0x58] sm:$0xff]
        %v302 = vld [vmem:[#allocation2 + $0x60] sm:$0xff]
        %v303 = vld [vmem:[#allocation2 + $0x68] sm:$0xff]
        %v304 = vld [vmem:[#allocation2 + $0x70] sm:$0xff]
        %v305 = vld [vmem:[#allocation2 + $0x78] sm:$0xff]
        %v306 = vld [vmem:[#allocation2 + $0x80] sm:$0xff]
        %v307 = vld [vmem:[#allocation2 + $0x88] sm:$0xff]
        %v308 = vld [vmem:[#allocation2 + $0x90] sm:$0xff]
        %v309 = vld [vmem:[#allocation2 + $0x98] sm:$0xff]
        %v310 = vld [vmem:[#allocation2 + $0xa0] sm:$0xff]
        %v311 = vld [vmem:[#allocation2 + $0xa8] sm:$0xff]
        %v312 = vld [vmem:[#allocation2 + $0xb0] sm:$0xff]
        %v313 = vld [vmem:[#allocation2 + $0xb8] sm:$0xff]
        %v314 = vld [vmem:[#allocation2 + $0xc0] sm:$0xff]
        %v315 = vld [vmem:[#allocation2 + $0xc8] sm:$0xff]
        %v316 = vld [vmem:[#allocation2 + $0xd0] sm:$0xff]
        %v317 = vld [vmem:[#allocation2 + $0xd8] sm:$0xff]
        %v318 = vld [vmem:[#allocation2 + $0xe0] sm:$0xff]
        %v319 = vld [vmem:[#allocation2 + $0xe8] sm:$0xff]
        %v320 = vld [vmem:[#allocation2 + $0xf0] sm:$0xff]
        %v321 = vld [vmem:[#allocation2 + $0xf8] sm:$0xff]
        %v322 = vld [vmem:[#allocation2 + $0x100] sm:$0xff]
        %v323 = vld [vmem:[#allocation2 + $0x108] sm:$0xff]
        %v324 = vld [vmem:[#allocation2 + $0x110] sm:$0xff]
        %v325 = vld [vmem:[#allocation2 + $0x118] sm:$0xff]
        %v326 = vld [vmem:[#allocation2 + $0x120] sm:$0xff]
        %v327 = vld [vmem:[#allocation2 + $0x128] sm:$0xff]
        %v328 = vld [vmem:[#allocation2 + $0x130] sm:$0xff]
        %v329 = vld [vmem:[#allocation2 + $0x138] sm:$0xff]
        %v330 = vld [vmem:[#allocation2 + $0x140] sm:$0xff]
        %v331 = vld [vmem:[#allocation2 + $0x148] sm:$0xff]
        %v332 = vld [vmem:[#allocation2 + $0x150] sm:$0xff]
        %v333 = vld [vmem:[#allocation2 + $0x158] sm:$0xff]
        %v334 = vld [vmem:[#allocation2 + $0x160] sm:$0xff]
        %v335 = vld [vmem:[#allocation2 + $0x168] sm:$0xff]
        %v336 = vld [vmem:[#allocation2 + $0x170] sm:$0xff]
        %v337 = vld [vmem:[#allocation2 + $0x178] sm:$0xff]
        %v338 = vld [vmem:[#allocation2 + $0x180] sm:$0xff]
        %v339 = vld [vmem:[#allocation2 + $0x188] sm:$0xff]
        %v340 = vld [vmem:[#allocation2 + $0x190] sm:$0xff]
        %v341 = vld [vmem:[#allocation2 + $0x198] sm:$0xff]
        %v342 = vld [vmem:[#allocation2 + $0x1a0] sm:$0xff]
        %v343 = vld [vmem:[#allocation2 + $0x1a8] sm:$0xff]
        %v344 = vld [vmem:[#allocation2 + $0x1b0] sm:$0xff]
        %v345 = vld [vmem:[#allocation2 + $0x1b8] sm:$0xff]
        %v346 = vld [vmem:[#allocation2 + $0x1c0] sm:$0xff]
        %v347 = vld [vmem:[#allocation2 + $0x1c8] sm:$0xff]
        %v348 = vld [vmem:[#allocation2 + $0x1d0] sm:$0xff]
        %v349 = vld [vmem:[#allocation2 + $0x1d8] sm:$0xff]
        %v350 = vld [vmem:[#allocation2 + $0x1e0] sm:$0xff]
        %v351 = vld [vmem:[#allocation2 + $0x1e8] sm:$0xff]
        %v352 = vld [vmem:[#allocation2 + $0x1f0] sm:$0xff]
        %v353 = vld [vmem:[#allocation2 + $0x1f8] sm:$0xff]
        %v354 = vld [vmem:[#allocation3] sm:$0xff]
        %v355 = vld [vmem:[#allocation3 + $0x8] sm:$0xff]
        %v356 = vld [vmem:[#allocation3 + $0x10] sm:$0xff]
        %v357 = vld [vmem:[#allocation3 + $0x18] sm:$0xff]
        %v358 = vld [vmem:[#allocation3 + $0x20] sm:$0xff]
        %v359 = vld [vmem:[#allocation3 + $0x28] sm:$0xff]
        %v360 = vld [vmem:[#allocation3 + $0x30] sm:$0xff]
        %v361 = vld [vmem:[#allocation3 + $0x38] sm:$0xff]
        %v362 = vld [vmem:[#allocation3 + $0x40] sm:$0xff]
        %v363 = vld [vmem:[#allocation3 + $0x48] sm:$0xff]
        %v364 = vld [vmem:[#allocation3 + $0x50] sm:$0xff]
        %v365 = vld [vmem:[#allocation3 + $0x58] sm:$0xff]
        %v366 = vld [vmem:[#allocation3 + $0x60] sm:$0xff]
        %v367 = vld [vmem:[#allocation3 + $0x68] sm:$0xff]
        %v368 = vld [vmem:[#allocation3 + $0x70] sm:$0xff]
        %v369 = vld [vmem:[#allocation3 + $0x78] sm:$0xff]
        %v370 = vld [vmem:[#allocation3 + $0x80] sm:$0xff]
        %v371 = vld [vmem:[#allocation3 + $0x88] sm:$0xff]
        %v372 = vld [vmem:[#allocation3 + $0x90] sm:$0xff]
        %v373 = vld [vmem:[#allocation3 + $0x98] sm:$0xff]
        %v374 = vld [vmem:[#allocation3 + $0xa0] sm:$0xff]
        %v375 = vld [vmem:[#allocation3 + $0xa8] sm:$0xff]
        %v376 = vld [vmem:[#allocation3 + $0xb0] sm:$0xff]
        %v377 = vld [vmem:[#allocation3 + $0xb8] sm:$0xff]
        %v378 = vld [vmem:[#allocation3 + $0xc0] sm:$0xff]
        %v379 = vld [vmem:[#allocation3 + $0xc8] sm:$0xff]
        %v380 = vld [vmem:[#allocation3 + $0xd0] sm:$0xff]
        %v381 = vld [vmem:[#allocation3 + $0xd8] sm:$0xff]
        %v382 = vld [vmem:[#allocation3 + $0xe0] sm:$0xff]
        %v383 = vld [vmem:[#allocation3 + $0xe8] sm:$0xff]
        %v384 = vld [vmem:[#allocation3 + $0xf0] sm:$0xff]
        %v385 = vld [vmem:[#allocation3 + $0xf8] sm:$0xff]
        %v386 = vld [vmem:[%s195] sm:$0xff]
        %v387 = vld [vmem:[%s195 + $0x8] sm:$0xff]
        %v388 = vld [vmem:[%s195 + $0x10] sm:$0xff]
        %v389 = vld [vmem:[%s195 + $0x18] sm:$0xff]
        %v390 = vld [vmem:[%s195 + $0x20] sm:$0xff]
        %v391 = vld [vmem:[%s195 + $0x28] sm:$0xff]
        %v392 = vld [vmem:[%s195 + $0x30] sm:$0xff]
        %v393 = vld [vmem:[%s195 + $0x38] sm:$0xff]
        %v394 = vld [vmem:[%s195 + $0x40] sm:$0xff]
        %v395 = vld [vmem:[%s195 + $0x48] sm:$0xff]
        %v396 = vld [vmem:[%s195 + $0x50] sm:$0xff]
        %v397 = vld [vmem:[%s195 + $0x58] sm:$0xff]
        %v398 = vld [vmem:[%s195 + $0x60] sm:$0xff]
        %v399 = vld [vmem:[%s195 + $0x68] sm:$0xff]
        %v400 = vld [vmem:[%s195 + $0x70] sm:$0xff]
        %v401 = vld [vmem:[%s195 + $0x78] sm:$0xff]
        %v402 = vld [vmem:[%s195 + $0x80] sm:$0xff]
        %v403 = vld [vmem:[%s195 + $0x88] sm:$0xff]
        %v404 = vld [vmem:[%s195 + $0x90] sm:$0xff]
        %v405 = vld [vmem:[%s195 + $0x98] sm:$0xff]
        %v406 = vld [vmem:[%s195 + $0xa0] sm:$0xff]
        %v407 = vld [vmem:[%s195 + $0xa8] sm:$0xff]
        %v408 = vld [vmem:[%s195 + $0xb0] sm:$0xff]
        %v409 = vld [vmem:[%s195 + $0xb8] sm:$0xff]
        %v410 = vld [vmem:[%s195 + $0xc0] sm:$0xff]
        %v411 = vld [vmem:[%s195 + $0xc8] sm:$0xff]
        %v412 = vld [vmem:[%s195 + $0xd0] sm:$0xff]
        %v413 = vld [vmem:[%s195 + $0xd8] sm:$0xff]
        %v414 = vld [vmem:[%s195 + $0xe0] sm:$0xff]
        %v415 = vld [vmem:[%s195 + $0xe8] sm:$0xff]
        %v416 = vld [vmem:[%s195 + $0xf0] sm:$0xff]
        %v417 = vld [vmem:[%s195 + $0xf8] sm:$0xff]
        %v418 = vld [vmem:[%s195 + $0x100] sm:$0xff]
        %v419 = vld [vmem:[%s195 + $0x108] sm:$0xff]
        %v420 = vld [vmem:[%s195 + $0x110] sm:$0xff]
        %v421 = vld [vmem:[%s195 + $0x118] sm:$0xff]
        %v422 = vld [vmem:[%s195 + $0x120] sm:$0xff]
        %v423 = vld [vmem:[%s195 + $0x128] sm:$0xff]
        %v424 = vld [vmem:[%s195 + $0x130] sm:$0xff]
        %v425 = vld [vmem:[%s195 + $0x138] sm:$0xff]
        %v426 = vld [vmem:[%s195 + $0x140] sm:$0xff]
        %v427 = vld [vmem:[%s195 + $0x148] sm:$0xff]
        %v428 = vld [vmem:[%s195 + $0x150] sm:$0xff]
        %v429 = vld [vmem:[%s195 + $0x158] sm:$0xff]
        %v430 = vld [vmem:[%s195 + $0x160] sm:$0xff]
        %v431 = vld [vmem:[%s195 + $0x168] sm:$0xff]
        %v432 = vld [vmem:[%s195 + $0x170] sm:$0xff]
        %v433 = vld [vmem:[%s195 + $0x178] sm:$0xff]
        %v434 = vld [vmem:[%s195 + $0x180] sm:$0xff]
        %v435 = vld [vmem:[%s195 + $0x188] sm:$0xff]
        %v436 = vld [vmem:[%s195 + $0x190] sm:$0xff]
        %v437 = vld [vmem:[%s195 + $0x198] sm:$0xff]
        %v438 = vld [vmem:[%s195 + $0x1a0] sm:$0xff]
        %v439 = vld [vmem:[%s195 + $0x1a8] sm:$0xff]
        %v440 = vld [vmem:[%s195 + $0x1b0] sm:$0xff]
        %v441 = vld [vmem:[%s195 + $0x1b8] sm:$0xff]
        %v442 = vld [vmem:[%s195 + $0x1c0] sm:$0xff]
        %v443 = vld [vmem:[%s195 + $0x1c8] sm:$0xff]
        %v444 = vld [vmem:[%s195 + $0x1d0] sm:$0xff]
        %v445 = vld [vmem:[%s195 + $0x1d8] sm:$0xff]
        %v446 = vld [vmem:[%s195 + $0x1e0] sm:$0xff]
        %v447 = vld [vmem:[%s195 + $0x1e8] sm:$0xff]
        %v448 = vld [vmem:[%s195 + $0x1f0] sm:$0xff]
        %v449 = vld [vmem:[%s195 + $0x1f8] sm:$0xff]
        %v450 = vld [vmem:[%s195 + $0x200] sm:$0xff]
        %v451 = vld [vmem:[%s195 + $0x208] sm:$0xff]
        %v452 = vld [vmem:[%s195 + $0x210] sm:$0xff]
        %v453 = vld [vmem:[%s195 + $0x218] sm:$0xff]
        %v454 = vld [vmem:[%s195 + $0x220] sm:$0xff]
        %v455 = vld [vmem:[%s195 + $0x228] sm:$0xff]
        %v456 = vld [vmem:[%s195 + $0x230] sm:$0xff]
        %v457 = vld [vmem:[%s195 + $0x238] sm:$0xff]
        %v458 = vld [vmem:[%s195 + $0x240] sm:$0xff]
        %v459 = vld [vmem:[%s195 + $0x248] sm:$0xff]
        %v460 = vld [vmem:[%s195 + $0x250] sm:$0xff]
        %v461 = vld [vmem:[%s195 + $0x258] sm:$0xff]
        %v462 = vld [vmem:[%s195 + $0x260] sm:$0xff]
        %v463 = vld [vmem:[%s195 + $0x268] sm:$0xff]
        %v464 = vld [vmem:[%s195 + $0x270] sm:$0xff]
        %v465 = vld [vmem:[%s195 + $0x278] sm:$0xff]
        %v466 = vld [vmem:[%s195 + $0x280] sm:$0xff]
        %v467 = vld [vmem:[%s195 + $0x288] sm:$0xff]
        %v468 = vld [vmem:[%s195 + $0x290] sm:$0xff]
        %v469 = vld [vmem:[%s195 + $0x298] sm:$0xff]
        %v470 = vld [vmem:[%s195 + $0x2a0] sm:$0xff]
        %v471 = vld [vmem:[%s195 + $0x2a8] sm:$0xff]
        %v472 = vld [vmem:[%s195 + $0x2b0] sm:$0xff]
        %v473 = vld [vmem:[%s195 + $0x2b8] sm:$0xff]
        %v474 = vld [vmem:[%s195 + $0x2c0] sm:$0xff]
        %v475 = vld [vmem:[%s195 + $0x2c8] sm:$0xff]
        %v476 = vld [vmem:[%s195 + $0x2d0] sm:$0xff]
        %v477 = vld [vmem:[%s195 + $0x2d8] sm:$0xff]
        %v478 = vld [vmem:[%s195 + $0x2e0] sm:$0xff]
        %v479 = vld [vmem:[%s195 + $0x2e8] sm:$0xff]
        %v480 = vld [vmem:[%s195 + $0x2f0] sm:$0xff]
        %v481 = vld [vmem:[%s195 + $0x2f8] sm:$0xff]
        %v482 = vld [vmem:[%s195 + $0x300] sm:$0xff]
        %v483 = vld [vmem:[%s195 + $0x308] sm:$0xff]
        %v484 = vld [vmem:[%s195 + $0x310] sm:$0xff]
        %v485 = vld [vmem:[%s195 + $0x318] sm:$0xff]
        %v486 = vld [vmem:[%s195 + $0x320] sm:$0xff]
        %v487 = vld [vmem:[%s195 + $0x328] sm:$0xff]
        %v488 = vld [vmem:[%s195 + $0x330] sm:$0xff]
        %v489 = vld [vmem:[%s195 + $0x338] sm:$0xff]
        %v490 = vld [vmem:[%s195 + $0x340] sm:$0xff]
        %v491 = vld [vmem:[%s195 + $0x348] sm:$0xff]
        %v492 = vld [vmem:[%s195 + $0x350] sm:$0xff]
        %v493 = vld [vmem:[%s195 + $0x358] sm:$0xff]
        %v494 = vld [vmem:[%s195 + $0x360] sm:$0xff]
        %v495 = vld [vmem:[%s195 + $0x368] sm:$0xff]
        %v496 = vld [vmem:[%s195 + $0x370] sm:$0xff]
        %v497 = vld [vmem:[%s195 + $0x378] sm:$0xff]
        %v498 = vld [vmem:[%s195 + $0x380] sm:$0xff]
        %v499 = vld [vmem:[%s195 + $0x388] sm:$0xff]
        %v500 = vld [vmem:[%s195 + $0x390] sm:$0xff]
        %v501 = vld [vmem:[%s195 + $0x398] sm:$0xff]
        %v502 = vld [vmem:[%s195 + $0x3a0] sm:$0xff]
        %v503 = vld [vmem:[%s195 + $0x3a8] sm:$0xff]
        %v504 = vld [vmem:[%s195 + $0x3b0] sm:$0xff]
        %v505 = vld [vmem:[%s195 + $0x3b8] sm:$0xff]
        %v506 = vld [vmem:[%s195 + $0x3c0] sm:$0xff]
        %v507 = vld [vmem:[%s195 + $0x3c8] sm:$0xff]
        %v508 = vld [vmem:[%s195 + $0x3d0] sm:$0xff]
        %v509 = vld [vmem:[%s195 + $0x3d8] sm:$0xff]
        %v510 = vld [vmem:[%s195 + $0x3e0] sm:$0xff]
        %v511 = vld [vmem:[%s195 + $0x3e8] sm:$0xff]
        %v512 = vld [vmem:[%s195 + $0x3f0] sm:$0xff]
        %v513 = vld [vmem:[%s195 + $0x3f8] sm:$0xff]
        %v546 = vunpack.c.l.b16 %v354
        %v547 = vunpack.c.h.b16 %v354
        %v548 = vunpack.c.l.b16 %v355
        %v549 = vunpack.c.h.b16 %v355
        %v550 = vunpack.c.l.b16 %v356
        %v551 = vunpack.c.h.b16 %v356
        %v552 = vunpack.c.l.b16 %v357
        %v553 = vunpack.c.h.b16 %v357
        %v554 = vunpack.c.l.b16 %v358
        %v555 = vunpack.c.h.b16 %v358
        %v556 = vunpack.c.l.b16 %v359
        %v557 = vunpack.c.h.b16 %v359
        %v558 = vunpack.c.l.b16 %v360
        %v559 = vunpack.c.h.b16 %v360
        %v560 = vunpack.c.l.b16 %v361
        %v561 = vunpack.c.h.b16 %v361
        %v562 = vunpack.c.l.b16 %v362
        %v563 = vunpack.c.h.b16 %v362
        %v564 = vunpack.c.l.b16 %v363
        %v565 = vunpack.c.h.b16 %v363
        %v566 = vunpack.c.l.b16 %v364
        %v567 = vunpack.c.h.b16 %v364
        %v568 = vunpack.c.l.b16 %v365
        %v569 = vunpack.c.h.b16 %v365
        %v570 = vunpack.c.l.b16 %v366
        %v571 = vunpack.c.h.b16 %v366
        %v572 = vunpack.c.l.b16 %v367
        %v573 = vunpack.c.h.b16 %v367
        %v574 = vunpack.c.l.b16 %v368
        %v575 = vunpack.c.h.b16 %v368
        %v576 = vunpack.c.l.b16 %v369
        %v577 = vunpack.c.h.b16 %v369
        %v578 = vunpack.c.l.b16 %v370
        %v579 = vunpack.c.h.b16 %v370
        %v580 = vunpack.c.l.b16 %v371
        %v581 = vunpack.c.h.b16 %v371
        %v582 = vunpack.c.l.b16 %v372
        %v583 = vunpack.c.h.b16 %v372
        %v584 = vunpack.c.l.b16 %v373
        %v585 = vunpack.c.h.b16 %v373
        %v586 = vunpack.c.l.b16 %v374
        %v587 = vunpack.c.h.b16 %v374
        %v588 = vunpack.c.l.b16 %v375
        %v589 = vunpack.c.h.b16 %v375
        %v590 = vunpack.c.l.b16 %v376
        %v591 = vunpack.c.h.b16 %v376
        %v592 = vunpack.c.l.b16 %v377
        %v593 = vunpack.c.h.b16 %v377
        %v594 = vunpack.c.l.b16 %v378
        %v595 = vunpack.c.h.b16 %v378
        %v596 = vunpack.c.l.b16 %v379
        %v597 = vunpack.c.h.b16 %v379
        %v598 = vunpack.c.l.b16 %v380
        %v599 = vunpack.c.h.b16 %v380
        %v600 = vunpack.c.l.b16 %v381
        %v601 = vunpack.c.h.b16 %v381
        %v602 = vunpack.c.l.b16 %v382
        %v603 = vunpack.c.h.b16 %v382
        %v604 = vunpack.c.l.b16 %v383
        %v605 = vunpack.c.h.b16 %v383
        %v606 = vunpack.c.l.b16 %v384
        %v607 = vunpack.c.h.b16 %v384
        %v608 = vunpack.c.l.b16 %v385
        %v609 = vunpack.c.h.b16 %v385
        %v610 = vpack.c.b16 %v550, %v546
        %v611 = vpack.c.b16 %v551, %v547
        %v612 = vpack.c.b16 %v552, %v548
        %v613 = vpack.c.b16 %v553, %v549
        %v614 = vpack.c.b16 %v558, %v554
        %v615 = vpack.c.b16 %v559, %v555
        %v616 = vpack.c.b16 %v560, %v556
        %v617 = vpack.c.b16 %v561, %v557
        %v618 = vpack.c.b16 %v566, %v562
        %v619 = vpack.c.b16 %v567, %v563
        %v620 = vpack.c.b16 %v568, %v564
        %v621 = vpack.c.b16 %v569, %v565
        %v622 = vpack.c.b16 %v574, %v570
        %v623 = vpack.c.b16 %v575, %v571
        %v624 = vpack.c.b16 %v576, %v572
        %v625 = vpack.c.b16 %v577, %v573
        %v626 = vpack.c.b16 %v582, %v578
        %v627 = vpack.c.b16 %v583, %v579
        %v628 = vpack.c.b16 %v584, %v580
        %v629 = vpack.c.b16 %v585, %v581
        %v630 = vpack.c.b16 %v590, %v586
        %v631 = vpack.c.b16 %v591, %v587
        %v632 = vpack.c.b16 %v592, %v588
        %v633 = vpack.c.b16 %v593, %v589
        %v634 = vpack.c.b16 %v598, %v594
        %v635 = vpack.c.b16 %v599, %v595
        %v636 = vpack.c.b16 %v600, %v596
        %v637 = vpack.c.b16 %v601, %v597
        %v638 = vpack.c.b16 %v606, %v602
        %v639 = vpack.c.b16 %v607, %v603
        %v640 = vpack.c.b16 %v608, %v604
        %v641 = vpack.c.b16 %v609, %v605
        %v802 = vunpack.c.l.b16 %v386
        %v803 = vunpack.c.h.b16 %v386
        %v804 = vunpack.c.l.b16 %v387
        %v805 = vunpack.c.h.b16 %v387
        %v806 = vunpack.c.l.b16 %v388
        %v807 = vunpack.c.h.b16 %v388
        %v808 = vunpack.c.l.b16 %v389
        %v809 = vunpack.c.h.b16 %v389
        %v810 = vunpack.c.l.b16 %v390
        %v811 = vunpack.c.h.b16 %v390
        %v812 = vunpack.c.l.b16 %v391
        %v813 = vunpack.c.h.b16 %v391
        %v814 = vunpack.c.l.b16 %v392
        %v815 = vunpack.c.h.b16 %v392
        %v816 = vunpack.c.l.b16 %v393
        %v817 = vunpack.c.h.b16 %v393
        %v818 = vunpack.c.l.b16 %v394
        %v819 = vunpack.c.h.b16 %v394
        %v820 = vunpack.c.l.b16 %v395
        %v821 = vunpack.c.h.b16 %v395
        %v822 = vunpack.c.l.b16 %v396
        %v823 = vunpack.c.h.b16 %v396
        %v824 = vunpack.c.l.b16 %v397
        %v825 = vunpack.c.h.b16 %v397
        %v826 = vunpack.c.l.b16 %v398
        %v827 = vunpack.c.h.b16 %v398
        %v828 = vunpack.c.l.b16 %v399
        %v829 = vunpack.c.h.b16 %v399
        %v830 = vunpack.c.l.b16 %v400
        %v831 = vunpack.c.h.b16 %v400
        %v832 = vunpack.c.l.b16 %v401
        %v833 = vunpack.c.h.b16 %v401
        %v834 = vunpack.c.l.b16 %v402
        %v835 = vunpack.c.h.b16 %v402
        %v836 = vunpack.c.l.b16 %v403
        %v837 = vunpack.c.h.b16 %v403
        %v838 = vunpack.c.l.b16 %v404
        %v839 = vunpack.c.h.b16 %v404
        %v840 = vunpack.c.l.b16 %v405
        %v841 = vunpack.c.h.b16 %v405
        %v842 = vunpack.c.l.b16 %v406
        %v843 = vunpack.c.h.b16 %v406
        %v844 = vunpack.c.l.b16 %v407
        %v845 = vunpack.c.h.b16 %v407
        %v846 = vunpack.c.l.b16 %v408
        %v847 = vunpack.c.h.b16 %v408
        %v848 = vunpack.c.l.b16 %v409
        %v849 = vunpack.c.h.b16 %v409
        %v850 = vunpack.c.l.b16 %v410
        %v851 = vunpack.c.h.b16 %v410
        %v852 = vunpack.c.l.b16 %v411
        %v853 = vunpack.c.h.b16 %v411
        %v854 = vunpack.c.l.b16 %v412
        %v855 = vunpack.c.h.b16 %v412
        %v856 = vunpack.c.l.b16 %v413
        %v857 = vunpack.c.h.b16 %v413
        %v858 = vunpack.c.l.b16 %v414
        %v859 = vunpack.c.h.b16 %v414
        %v860 = vunpack.c.l.b16 %v415
        %v861 = vunpack.c.h.b16 %v415
        %v862 = vunpack.c.l.b16 %v416
        %v863 = vunpack.c.h.b16 %v416
        %v864 = vunpack.c.l.b16 %v417
        %v865 = vunpack.c.h.b16 %v417
        %v866 = vunpack.c.l.b16 %v418
        %v867 = vunpack.c.h.b16 %v418
        %v868 = vunpack.c.l.b16 %v419
        %v869 = vunpack.c.h.b16 %v419
        %v870 = vunpack.c.l.b16 %v420
        %v871 = vunpack.c.h.b16 %v420
        %v872 = vunpack.c.l.b16 %v421
        %v873 = vunpack.c.h.b16 %v421
        %v874 = vunpack.c.l.b16 %v422
        %v875 = vunpack.c.h.b16 %v422
        %v876 = vunpack.c.l.b16 %v423
        %v877 = vunpack.c.h.b16 %v423
        %v878 = vunpack.c.l.b16 %v424
        %v879 = vunpack.c.h.b16 %v424
        %v880 = vunpack.c.l.b16 %v425
        %v881 = vunpack.c.h.b16 %v425
        %v882 = vunpack.c.l.b16 %v426
        %v883 = vunpack.c.h.b16 %v426
        %v884 = vunpack.c.l.b16 %v427
        %v885 = vunpack.c.h.b16 %v427
        %v886 = vunpack.c.l.b16 %v428
        %v887 = vunpack.c.h.b16 %v428
        %v888 = vunpack.c.l.b16 %v429
        %v889 = vunpack.c.h.b16 %v429
        %v890 = vunpack.c.l.b16 %v430
        %v891 = vunpack.c.h.b16 %v430
        %v892 = vunpack.c.l.b16 %v431
        %v893 = vunpack.c.h.b16 %v431
        %v894 = vunpack.c.l.b16 %v432
        %v895 = vunpack.c.h.b16 %v432
        %v896 = vunpack.c.l.b16 %v433
        %v897 = vunpack.c.h.b16 %v433
        %v898 = vunpack.c.l.b16 %v434
        %v899 = vunpack.c.h.b16 %v434
        %v900 = vunpack.c.l.b16 %v435
        %v901 = vunpack.c.h.b16 %v435
        %v902 = vunpack.c.l.b16 %v436
        %v903 = vunpack.c.h.b16 %v436
        %v904 = vunpack.c.l.b16 %v437
        %v905 = vunpack.c.h.b16 %v437
        %v906 = vunpack.c.l.b16 %v438
        %v907 = vunpack.c.h.b16 %v438
        %v908 = vunpack.c.l.b16 %v439
        %v909 = vunpack.c.h.b16 %v439
        %v910 = vunpack.c.l.b16 %v440
        %v911 = vunpack.c.h.b16 %v440
        %v912 = vunpack.c.l.b16 %v441
        %v913 = vunpack.c.h.b16 %v441
        %v914 = vunpack.c.l.b16 %v442
        %v915 = vunpack.c.h.b16 %v442
        %v916 = vunpack.c.l.b16 %v443
        %v917 = vunpack.c.h.b16 %v443
        %v918 = vunpack.c.l.b16 %v444
        %v919 = vunpack.c.h.b16 %v444
        %v920 = vunpack.c.l.b16 %v445
        %v921 = vunpack.c.h.b16 %v445
        %v922 = vunpack.c.l.b16 %v446
        %v923 = vunpack.c.h.b16 %v446
        %v924 = vunpack.c.l.b16 %v447
        %v925 = vunpack.c.h.b16 %v447
        %v926 = vunpack.c.l.b16 %v448
        %v927 = vunpack.c.h.b16 %v448
        %v928 = vunpack.c.l.b16 %v449
        %v929 = vunpack.c.h.b16 %v449
        %v930 = vunpack.c.l.b16 %v450
        %v931 = vunpack.c.h.b16 %v450
        %v932 = vunpack.c.l.b16 %v451
        %v933 = vunpack.c.h.b16 %v451
        %v934 = vunpack.c.l.b16 %v452
        %v935 = vunpack.c.h.b16 %v452
        %v936 = vunpack.c.l.b16 %v453
        %v937 = vunpack.c.h.b16 %v453
        %v938 = vunpack.c.l.b16 %v454
        %v939 = vunpack.c.h.b16 %v454
        %v940 = vunpack.c.l.b16 %v455
        %v941 = vunpack.c.h.b16 %v455
        %v942 = vunpack.c.l.b16 %v456
        %v943 = vunpack.c.h.b16 %v456
        %v944 = vunpack.c.l.b16 %v457
        %v945 = vunpack.c.h.b16 %v457
        %v946 = vunpack.c.l.b16 %v458
        %v947 = vunpack.c.h.b16 %v458
        %v948 = vunpack.c.l.b16 %v459
        %v949 = vunpack.c.h.b16 %v459
        %v950 = vunpack.c.l.b16 %v460
        %v951 = vunpack.c.h.b16 %v460
        %v952 = vunpack.c.l.b16 %v461
        %v953 = vunpack.c.h.b16 %v461
        %v954 = vunpack.c.l.b16 %v462
        %v955 = vunpack.c.h.b16 %v462
        %v956 = vunpack.c.l.b16 %v463
        %v957 = vunpack.c.h.b16 %v463
        %v958 = vunpack.c.l.b16 %v464
        %v959 = vunpack.c.h.b16 %v464
        %v960 = vunpack.c.l.b16 %v465
        %v961 = vunpack.c.h.b16 %v465
        %v962 = vunpack.c.l.b16 %v466
        %v963 = vunpack.c.h.b16 %v466
        %v964 = vunpack.c.l.b16 %v467
        %v965 = vunpack.c.h.b16 %v467
        %v966 = vunpack.c.l.b16 %v468
        %v967 = vunpack.c.h.b16 %v468
        %v968 = vunpack.c.l.b16 %v469
        %v969 = vunpack.c.h.b16 %v469
        %v970 = vunpack.c.l.b16 %v470
        %v971 = vunpack.c.h.b16 %v470
        %v972 = vunpack.c.l.b16 %v471
        %v973 = vunpack.c.h.b16 %v471
        %v974 = vunpack.c.l.b16 %v472
        %v975 = vunpack.c.h.b16 %v472
        %v976 = vunpack.c.l.b16 %v473
        %v977 = vunpack.c.h.b16 %v473
        %v978 = vunpack.c.l.b16 %v474
        %v979 = vunpack.c.h.b16 %v474
        %v980 = vunpack.c.l.b16 %v475
        %v981 = vunpack.c.h.b16 %v475
        %v982 = vunpack.c.l.b16 %v476
        %v983 = vunpack.c.h.b16 %v476
        %v984 = vunpack.c.l.b16 %v477
        %v985 = vunpack.c.h.b16 %v477
        %v986 = vunpack.c.l.b16 %v478
        %v987 = vunpack.c.h.b16 %v478
        %v988 = vunpack.c.l.b16 %v479
        %v989 = vunpack.c.h.b16 %v479
        %v990 = vunpack.c.l.b16 %v480
        %v991 = vunpack.c.h.b16 %v480
        %v992 = vunpack.c.l.b16 %v481
        %v993 = vunpack.c.h.b16 %v481
        %v994 = vunpack.c.l.b16 %v482
        %v995 = vunpack.c.h.b16 %v482
        %v996 = vunpack.c.l.b16 %v483
        %v997 = vunpack.c.h.b16 %v483
        %v998 = vunpack.c.l.b16 %v484
        %v999 = vunpack.c.h.b16 %v484
        %v1000 = vunpack.c.l.b16 %v485
        %v1001 = vunpack.c.h.b16 %v485
        %v1002 = vunpack.c.l.b16 %v486
        %v1003 = vunpack.c.h.b16 %v486
        %v1004 = vunpack.c.l.b16 %v487
        %v1005 = vunpack.c.h.b16 %v487
        %v1006 = vunpack.c.l.b16 %v488
        %v1007 = vunpack.c.h.b16 %v488
        %v1008 = vunpack.c.l.b16 %v489
        %v1009 = vunpack.c.h.b16 %v489
        %v1010 = vunpack.c.l.b16 %v490
        %v1011 = vunpack.c.h.b16 %v490
        %v1012 = vunpack.c.l.b16 %v491
        %v1013 = vunpack.c.h.b16 %v491
        %v1014 = vunpack.c.l.b16 %v492
        %v1015 = vunpack.c.h.b16 %v492
        %v1016 = vunpack.c.l.b16 %v493
        %v1017 = vunpack.c.h.b16 %v493
        %v1018 = vunpack.c.l.b16 %v494
        %v1019 = vunpack.c.h.b16 %v494
        %v1020 = vunpack.c.l.b16 %v495
        %v1021 = vunpack.c.h.b16 %v495
        %v1022 = vunpack.c.l.b16 %v496
        %v1023 = vunpack.c.h.b16 %v496
        %v1024 = vunpack.c.l.b16 %v497
        %v1025 = vunpack.c.h.b16 %v497
        %v1026 = vunpack.c.l.b16 %v498
        %v1027 = vunpack.c.h.b16 %v498
        %v1028 = vunpack.c.l.b16 %v499
        %v1029 = vunpack.c.h.b16 %v499
        %v1030 = vunpack.c.l.b16 %v500
        %v1031 = vunpack.c.h.b16 %v500
        %v1032 = vunpack.c.l.b16 %v501
        %v1033 = vunpack.c.h.b16 %v501
        %v1034 = vunpack.c.l.b16 %v502
        %v1035 = vunpack.c.h.b16 %v502
        %v1036 = vunpack.c.l.b16 %v503
        %v1037 = vunpack.c.h.b16 %v503
        %v1038 = vunpack.c.l.b16 %v504
        %v1039 = vunpack.c.h.b16 %v504
        %v1040 = vunpack.c.l.b16 %v505
        %v1041 = vunpack.c.h.b16 %v505
        %v1042 = vunpack.c.l.b16 %v506
        %v1043 = vunpack.c.h.b16 %v506
        %v1044 = vunpack.c.l.b16 %v507
        %v1045 = vunpack.c.h.b16 %v507
        %v1046 = vunpack.c.l.b16 %v508
        %v1047 = vunpack.c.h.b16 %v508
        %v1048 = vunpack.c.l.b16 %v509
        %v1049 = vunpack.c.h.b16 %v509
        %v1050 = vunpack.c.l.b16 %v510
        %v1051 = vunpack.c.h.b16 %v510
        %v1052 = vunpack.c.l.b16 %v511
        %v1053 = vunpack.c.h.b16 %v511
        %v1054 = vunpack.c.l.b16 %v512
        %v1055 = vunpack.c.h.b16 %v512
        %v1056 = vunpack.c.l.b16 %v513
        %v1057 = vunpack.c.h.b16 %v513
        %v1058 = vpack.c.b16 %v806, %v802
        %v1059 = vpack.c.b16 %v807, %v803
        %v1060 = vpack.c.b16 %v808, %v804
        %v1061 = vpack.c.b16 %v809, %v805
        %v1062 = vpack.c.b16 %v814, %v810
        %v1063 = vpack.c.b16 %v815, %v811
        %v1064 = vpack.c.b16 %v816, %v812
        %v1065 = vpack.c.b16 %v817, %v813
        %v1066 = vpack.c.b16 %v822, %v818
        %v1067 = vpack.c.b16 %v823, %v819
        %v1068 = vpack.c.b16 %v824, %v820
        %v1069 = vpack.c.b16 %v825, %v821
        %v1070 = vpack.c.b16 %v830, %v826
        %v1071 = vpack.c.b16 %v831, %v827
        %v1072 = vpack.c.b16 %v832, %v828
        %v1073 = vpack.c.b16 %v833, %v829
        %v1074 = vpack.c.b16 %v838, %v834
        %v1075 = vpack.c.b16 %v839, %v835
        %v1076 = vpack.c.b16 %v840, %v836
        %v1077 = vpack.c.b16 %v841, %v837
        %v1078 = vpack.c.b16 %v846, %v842
        %v1079 = vpack.c.b16 %v847, %v843
        %v1080 = vpack.c.b16 %v848, %v844
        %v1081 = vpack.c.b16 %v849, %v845
        %v1082 = vpack.c.b16 %v854, %v850
        %v1083 = vpack.c.b16 %v855, %v851
        %v1084 = vpack.c.b16 %v856, %v852
        %v1085 = vpack.c.b16 %v857, %v853
        %v1086 = vpack.c.b16 %v862, %v858
        %v1087 = vpack.c.b16 %v863, %v859
        %v1088 = vpack.c.b16 %v864, %v860
        %v1089 = vpack.c.b16 %v865, %v861
        %v1090 = vpack.c.b16 %v870, %v866
        %v1091 = vpack.c.b16 %v871, %v867
        %v1092 = vpack.c.b16 %v872, %v868
        %v1093 = vpack.c.b16 %v873, %v869
        %v1094 = vpack.c.b16 %v878, %v874
        %v1095 = vpack.c.b16 %v879, %v875
        %v1096 = vpack.c.b16 %v880, %v876
        %v1097 = vpack.c.b16 %v881, %v877
        %v1098 = vpack.c.b16 %v886, %v882
        %v1099 = vpack.c.b16 %v887, %v883
        %v1100 = vpack.c.b16 %v888, %v884
        %v1101 = vpack.c.b16 %v889, %v885
        %v1102 = vpack.c.b16 %v894, %v890
        %v1103 = vpack.c.b16 %v895, %v891
        %v1104 = vpack.c.b16 %v896, %v892
        %v1105 = vpack.c.b16 %v897, %v893
        %v1106 = vpack.c.b16 %v902, %v898
        %v1107 = vpack.c.b16 %v903, %v899
        %v1108 = vpack.c.b16 %v904, %v900
        %v1109 = vpack.c.b16 %v905, %v901
        %v1110 = vpack.c.b16 %v910, %v906
        %v1111 = vpack.c.b16 %v911, %v907
        %v1112 = vpack.c.b16 %v912, %v908
        %v1113 = vpack.c.b16 %v913, %v909
        %v1114 = vpack.c.b16 %v918, %v914
        %v1115 = vpack.c.b16 %v919, %v915
        %v1116 = vpack.c.b16 %v920, %v916
        %v1117 = vpack.c.b16 %v921, %v917
        %v1118 = vpack.c.b16 %v926, %v922
        %v1119 = vpack.c.b16 %v927, %v923
        %v1120 = vpack.c.b16 %v928, %v924
        %v1121 = vpack.c.b16 %v929, %v925
        %v1122 = vpack.c.b16 %v934, %v930
        %v1123 = vpack.c.b16 %v935, %v931
        %v1124 = vpack.c.b16 %v936, %v932
        %v1125 = vpack.c.b16 %v937, %v933
        %v1126 = vpack.c.b16 %v942, %v938
        %v1127 = vpack.c.b16 %v943, %v939
        %v1128 = vpack.c.b16 %v944, %v940
        %v1129 = vpack.c.b16 %v945, %v941
        %v1130 = vpack.c.b16 %v950, %v946
        %v1131 = vpack.c.b16 %v951, %v947
        %v1132 = vpack.c.b16 %v952, %v948
        %v1133 = vpack.c.b16 %v953, %v949
        %v1134 = vpack.c.b16 %v958, %v954
        %v1135 = vpack.c.b16 %v959, %v955
        %v1136 = vpack.c.b16 %v960, %v956
        %v1137 = vpack.c.b16 %v961, %v957
        %v1138 = vpack.c.b16 %v966, %v962
        %v1139 = vpack.c.b16 %v967, %v963
        %v1140 = vpack.c.b16 %v968, %v964
        %v1141 = vpack.c.b16 %v969, %v965
        %v1142 = vpack.c.b16 %v974, %v970
        %v1143 = vpack.c.b16 %v975, %v971
        %v1144 = vpack.c.b16 %v976, %v972
        %v1145 = vpack.c.b16 %v977, %v973
        %v1146 = vpack.c.b16 %v982, %v978
        %v1147 = vpack.c.b16 %v983, %v979
        %v1148 = vpack.c.b16 %v984, %v980
        %v1149 = vpack.c.b16 %v985, %v981
        %v1150 = vpack.c.b16 %v990, %v986
        %v1151 = vpack.c.b16 %v991, %v987
        %v1152 = vpack.c.b16 %v992, %v988
        %v1153 = vpack.c.b16 %v993, %v989
        %v1154 = vpack.c.b16 %v998, %v994
        %v1155 = vpack.c.b16 %v999, %v995
        %v1156 = vpack.c.b16 %v1000, %v996
        %v1157 = vpack.c.b16 %v1001, %v997
        %v1158 = vpack.c.b16 %v1006, %v1002
        %v1159 = vpack.c.b16 %v1007, %v1003
        %v1160 = vpack.c.b16 %v1008, %v1004
        %v1161 = vpack.c.b16 %v1009, %v1005
        %v1162 = vpack.c.b16 %v1014, %v1010
        %v1163 = vpack.c.b16 %v1015, %v1011
        %v1164 = vpack.c.b16 %v1016, %v1012
        %v1165 = vpack.c.b16 %v1017, %v1013
        %v1166 = vpack.c.b16 %v1022, %v1018
        %v1167 = vpack.c.b16 %v1023, %v1019
        %v1168 = vpack.c.b16 %v1024, %v1020
        %v1169 = vpack.c.b16 %v1025, %v1021
        %v1170 = vpack.c.b16 %v1030, %v1026
        %v1171 = vpack.c.b16 %v1031, %v1027
        %v1172 = vpack.c.b16 %v1032, %v1028
        %v1173 = vpack.c.b16 %v1033, %v1029
        %v1174 = vpack.c.b16 %v1038, %v1034
        %v1175 = vpack.c.b16 %v1039, %v1035
        %v1176 = vpack.c.b16 %v1040, %v1036
        %v1177 = vpack.c.b16 %v1041, %v1037
        %v1178 = vpack.c.b16 %v1046, %v1042
        %v1179 = vpack.c.b16 %v1047, %v1043
        %v1180 = vpack.c.b16 %v1048, %v1044
        %v1181 = vpack.c.b16 %v1049, %v1045
        %v1182 = vpack.c.b16 %v1054, %v1050
        %v1183 = vpack.c.b16 %v1055, %v1051
        %v1184 = vpack.c.b16 %v1056, %v1052
        %v1185 = vpack.c.b16 %v1057, %v1053
        %1314 = vmatprep.subr.bf16.mxu0 %v1059
        %1315 = vmatpush1.bf16.msra.mxu0 %v1058
        %1316 = vmatprep.subr.bf16.mxu0 %v1063
        %1317 = vmatpush1.bf16.msra.mxu0 %v1062
        %1318 = vmatprep.subr.bf16.mxu0 %v1067
        %1319 = vmatpush1.bf16.msra.mxu0 %v1066
        %1320 = vmatprep.subr.bf16.mxu0 %v1071
        %1321 = vmatpush1.bf16.msra.mxu0 %v1070
        %1322 = vmatprep.subr.bf16.mxu0 %v1075
        %1323 = vmatpush1.bf16.msra.mxu0 %v1074
        %1324 = vmatprep.subr.bf16.mxu0 %v1079
        %1325 = vmatpush1.bf16.msra.mxu0 %v1078
        %1326 = vmatprep.subr.bf16.mxu0 %v1083
        %1327 = vmatpush1.bf16.msra.mxu0 %v1082
        %1328 = vmatprep.subr.bf16.mxu0 %v1087
        %1329 = vmatpush1.bf16.msra.mxu0 %v1086
        %1330 = vmatprep.subr.bf16.mxu0 %v1091
        %1331 = vmatpush1.bf16.msra.mxu0 %v1090
        %1332 = vmatprep.subr.bf16.mxu0 %v1095
        %1333 = vmatpush1.bf16.msra.mxu0 %v1094
        %1334 = vmatprep.subr.bf16.mxu0 %v1099
        %1335 = vmatpush1.bf16.msra.mxu0 %v1098
        %1336 = vmatprep.subr.bf16.mxu0 %v1103
        %1337 = vmatpush1.bf16.msra.mxu0 %v1102
        %1338 = vmatprep.subr.bf16.mxu0 %v1107
        %1339 = vmatpush1.bf16.msra.mxu0 %v1106
        %1340 = vmatprep.subr.bf16.mxu0 %v1111
        %1341 = vmatpush1.bf16.msra.mxu0 %v1110
        %1342 = vmatprep.subr.bf16.mxu0 %v1115
        %1343 = vmatpush1.bf16.msra.mxu0 %v1114
        %1344 = vmatprep.subr.bf16.mxu0 %v1119
        %1345 = vmatpush1.bf16.msra.mxu0 %v1118
        %1346 = vmatprep.mubr.bf16.mxu0 %v611
        %1347 = vmatmul.mubr.bf16.gmra.mrb[0].mxu0 %v610
        %v1348 = vpop.f32.mrb[0].mxu0
        %v1349 = vadd.f32 0.0, %v1348
        %v1350 = vpop.f32.mrb[0].mxu0
        %v1351 = vadd.f32 0.0, %v1350
        %v1352 = vpop.f32.mrb[0].mxu0
        %v1353 = vadd.f32 0.0, %v1352
        %v1354 = vpop.f32.mrb[0].mxu0
        %v1355 = vadd.f32 0.0, %v1354
        %1356 = vmatprep.mubr.bf16.mxu0 %v615
        %1357 = vmatmul.mubr.bf16.gmra.mrb[0].mxu0 %v614
        %v1358 = vpop.f32.mrb[0].mxu0
        %v1359 = vadd.f32 0.0, %v1358
        %v1360 = vpop.f32.mrb[0].mxu0
        %v1361 = vadd.f32 0.0, %v1360
        %v1362 = vpop.f32.mrb[0].mxu0
        %v1363 = vadd.f32 0.0, %v1362
        %v1364 = vpop.f32.mrb[0].mxu0
        %v1365 = vadd.f32 0.0, %v1364
        %1366 = vmatprep.mubr.bf16.mxu0 %v619
        %1367 = vmatmul.mubr.bf16.gmra.mrb[0].mxu0 %v618
        %v1368 = vpop.f32.mrb[0].mxu0
        %v1369 = vadd.f32 0.0, %v1368
        %v1370 = vpop.f32.mrb[0].mxu0
        %v1371 = vadd.f32 0.0, %v1370
        %v1372 = vpop.f32.mrb[0].mxu0
        %v1373 = vadd.f32 0.0, %v1372
        %v1374 = vpop.f32.mrb[0].mxu0
        %v1375 = vadd.f32 0.0, %v1374
        %1376 = vmatprep.mubr.bf16.mxu0 %v623
        %1377 = vmatmul.mubr.bf16.gmra.mrb[0].mxu0 %v622
        %v1378 = vpop.f32.mrb[0].mxu0
        %v1379 = vadd.f32 0.0, %v1378
        %v1380 = vpop.f32.mrb[0].mxu0
        %v1381 = vadd.f32 0.0, %v1380
        %v1382 = vpop.f32.mrb[0].mxu0
        %v1383 = vadd.f32 0.0, %v1382
        %v1384 = vpop.f32.mrb[0].mxu0
        %v1385 = vadd.f32 0.0, %v1384
        %1386 = vmatprep.mubr.bf16.mxu0 %v627
        %1387 = vmatmul.mubr.bf16.gmra.mrb[0].mxu0 %v626
        %v1388 = vpop.f32.mrb[0].mxu0
        %v1389 = vadd.f32 0.0, %v1388
        %v1390 = vpop.f32.mrb[0].mxu0
        %v1391 = vadd.f32 0.0, %v1390
        %v1392 = vpop.f32.mrb[0].mxu0
        %v1393 = vadd.f32 0.0, %v1392
        %v1394 = vpop.f32.mrb[0].mxu0
        %v1395 = vadd.f32 0.0, %v1394
        %1396 = vmatprep.mubr.bf16.mxu0 %v631
        %1397 = vmatmul.mubr.bf16.gmra.mrb[0].mxu0 %v630
        %v1398 = vpop.f32.mrb[0].mxu0
        %v1399 = vadd.f32 0.0, %v1398
        %v1400 = vpop.f32.mrb[0].mxu0
        %v1401 = vadd.f32 0.0, %v1400
        %v1402 = vpop.f32.mrb[0].mxu0
        %v1403 = vadd.f32 0.0, %v1402
        %v1404 = vpop.f32.mrb[0].mxu0
        %v1405 = vadd.f32 0.0, %v1404
        %1406 = vmatprep.mubr.bf16.mxu0 %v635
        %1407 = vmatmul.mubr.bf16.gmra.mrb[0].mxu0 %v634
        %v1408 = vpop.f32.mrb[0].mxu0
        %v1409 = vadd.f32 0.0, %v1408
        %v1410 = vpop.f32.mrb[0].mxu0
        %v1411 = vadd.f32 0.0, %v1410
        %v1412 = vpop.f32.mrb[0].mxu0
        %v1413 = vadd.f32 0.0, %v1412
        %v1414 = vpop.f32.mrb[0].mxu0
        %v1415 = vadd.f32 0.0, %v1414
        %1416 = vmatprep.mubr.bf16.mxu0 %v639
        %1417 = vmatmul.mubr.bf16.gmra.mrb[0].mxu0 %v638
        %v1418 = vpop.f32.mrb[0].mxu0
        %v1419 = vadd.f32 0.0, %v1418
        %v1420 = vpop.f32.mrb[0].mxu0
        %v1421 = vadd.f32 0.0, %v1420
        %v1422 = vpop.f32.mrb[0].mxu0
        %v1423 = vadd.f32 0.0, %v1422
        %v1424 = vpop.f32.mrb[0].mxu0
        %v1425 = vadd.f32 0.0, %v1424
        %1426 = vdwg.mxu0
        %1427 = vmatprep.subr.bf16.mxu0 %v1123
        %1428 = vmatpush1.bf16.msra.mxu0 %v1122
        %1429 = vmatprep.subr.bf16.mxu0 %v1127
        %1430 = vmatpush1.bf16.msra.mxu0 %v1126
        %1431 = vmatprep.subr.bf16.mxu0 %v1131
        %1432 = vmatpush1.bf16.msra.mxu0 %v1130
        %1433 = vmatprep.subr.bf16.mxu0 %v1135
        %1434 = vmatpush1.bf16.msra.mxu0 %v1134
        %1435 = vmatprep.subr.bf16.mxu0 %v1139
        %1436 = vmatpush1.bf16.msra.mxu0 %v1138
        %1437 = vmatprep.subr.bf16.mxu0 %v1143
        %1438 = vmatpush1.bf16.msra.mxu0 %v1142
        %1439 = vmatprep.subr.bf16.mxu0 %v1147
        %1440 = vmatpush1.bf16.msra.mxu0 %v1146
        %1441 = vmatprep.subr.bf16.mxu0 %v1151
        %1442 = vmatpush1.bf16.msra.mxu0 %v1150
        %1443 = vmatprep.subr.bf16.mxu0 %v1155
        %1444 = vmatpush1.bf16.msra.mxu0 %v1154
        %1445 = vmatprep.subr.bf16.mxu0 %v1159
        %1446 = vmatpush1.bf16.msra.mxu0 %v1158
        %1447 = vmatprep.subr.bf16.mxu0 %v1163
        %1448 = vmatpush1.bf16.msra.mxu0 %v1162
        %1449 = vmatprep.subr.bf16.mxu0 %v1167
        %1450 = vmatpush1.bf16.msra.mxu0 %v1166
        %1451 = vmatprep.subr.bf16.mxu0 %v1171
        %1452 = vmatpush1.bf16.msra.mxu0 %v1170
        %1453 = vmatprep.subr.bf16.mxu0 %v1175
        %1454 = vmatpush1.bf16.msra.mxu0 %v1174
        %1455 = vmatprep.subr.bf16.mxu0 %v1179
        %1456 = vmatpush1.bf16.msra.mxu0 %v1178
        %1457 = vmatprep.subr.bf16.mxu0 %v1183
        %1458 = vmatpush1.bf16.msra.mxu0 %v1182
        %1459 = vmatprep.mubr.bf16.mxu0 %v613
        %1460 = vmatmul.mubr.bf16.gmra.mrb[0].mxu0 %v612
        %v1461 = vpop.f32.mrb[0].mxu0
        %v1462 = vadd.f32 %v1349, %v1461
        %v1463 = vpop.f32.mrb[0].mxu0
        %v1464 = vadd.f32 %v1351, %v1463
        %v1465 = vpop.f32.mrb[0].mxu0
        %v1466 = vadd.f32 %v1353, %v1465
        %v1467 = vpop.f32.mrb[0].mxu0
        %v1468 = vadd.f32 %v1355, %v1467
        %1469 = vmatprep.mubr.bf16.mxu0 %v617
        %1470 = vmatmul.mubr.bf16.gmra.mrb[0].mxu0 %v616
        %v1471 = vpop.f32.mrb[0].mxu0
        %v1472 = vadd.f32 %v1359, %v1471
        %v1473 = vpop.f32.mrb[0].mxu0
        %v1474 = vadd.f32 %v1361, %v1473
        %v1475 = vpop.f32.mrb[0].mxu0
        %v1476 = vadd.f32 %v1363, %v1475
        %v1477 = vpop.f32.mrb[0].mxu0
        %v1478 = vadd.f32 %v1365, %v1477
        %1479 = vmatprep.mubr.bf16.mxu0 %v621
        %1480 = vmatmul.mubr.bf16.gmra.mrb[0].mxu0 %v620
        %v1481 = vpop.f32.mrb[0].mxu0
        %v1482 = vadd.f32 %v1369, %v1481
        %v1483 = vpop.f32.mrb[0].mxu0
        %v1484 = vadd.f32 %v1371, %v1483
        %v1485 = vpop.f32.mrb[0].mxu0
        %v1486 = vadd.f32 %v1373, %v1485
        %v1487 = vpop.f32.mrb[0].mxu0
        %v1488 = vadd.f32 %v1375, %v1487
        %1489 = vmatprep.mubr.bf16.mxu0 %v625
        %1490 = vmatmul.mubr.bf16.gmra.mrb[0].mxu0 %v624
        %v1491 = vpop.f32.mrb[0].mxu0
        %v1492 = vadd.f32 %v1379, %v1491
        %v1493 = vpop.f32.mrb[0].mxu0
        %v1494 = vadd.f32 %v1381, %v1493
        %v1495 = vpop.f32.mrb[0].mxu0
        %v1496 = vadd.f32 %v1383, %v1495
        %v1497 = vpop.f32.mrb[0].mxu0
        %v1498 = vadd.f32 %v1385, %v1497
        %1499 = vmatprep.mubr.bf16.mxu0 %v629
        %1500 = vmatmul.mubr.bf16.gmra.mrb[0].mxu0 %v628
        %v1501 = vpop.f32.mrb[0].mxu0
        %v1502 = vadd.f32 %v1389, %v1501
        %v1503 = vpop.f32.mrb[0].mxu0
        %v1504 = vadd.f32 %v1391, %v1503
        %v1505 = vpop.f32.mrb[0].mxu0
        %v1506 = vadd.f32 %v1393, %v1505
        %v1507 = vpop.f32.mrb[0].mxu0
        %v1508 = vadd.f32 %v1395, %v1507
        %1509 = vmatprep.mubr.bf16.mxu0 %v633
        %1510 = vmatmul.mubr.bf16.gmra.mrb[0].mxu0 %v632
        %v1511 = vpop.f32.mrb[0].mxu0
        %v1512 = vadd.f32 %v1399, %v1511
        %v1513 = vpop.f32.mrb[0].mxu0
        %v1514 = vadd.f32 %v1401, %v1513
        %v1515 = vpop.f32.mrb[0].mxu0
        %v1516 = vadd.f32 %v1403, %v1515
        %v1517 = vpop.f32.mrb[0].mxu0
        %v1518 = vadd.f32 %v1405, %v1517
        %1519 = vmatprep.mubr.bf16.mxu0 %v637
        %1520 = vmatmul.mubr.bf16.gmra.mrb[0].mxu0 %v636
        %v1521 = vpop.f32.mrb[0].mxu0
        %v1522 = vadd.f32 %v1409, %v1521
        %v1523 = vpop.f32.mrb[0].mxu0
        %v1524 = vadd.f32 %v1411, %v1523
        %v1525 = vpop.f32.mrb[0].mxu0
        %v1526 = vadd.f32 %v1413, %v1525
        %v1527 = vpop.f32.mrb[0].mxu0
        %v1528 = vadd.f32 %v1415, %v1527
        %1529 = vmatprep.mubr.bf16.mxu0 %v641
        %1530 = vmatmul.mubr.bf16.gmra.mrb[0].mxu0 %v640
        %v1531 = vpop.f32.mrb[0].mxu0
        %v1532 = vadd.f32 %v1419, %v1531
        %v1533 = vpop.f32.mrb[0].mxu0
        %v1534 = vadd.f32 %v1421, %v1533
        %v1535 = vpop.f32.mrb[0].mxu0
        %v1536 = vadd.f32 %v1423, %v1535
        %v1537 = vpop.f32.mrb[0].mxu0
        %v1538 = vadd.f32 %v1425, %v1537
        %1539 = vdwg.mxu0
        %1540 = vmatprep.subr.bf16.mxu0 %v1061
        %1541 = vmatpush1.bf16.msra.mxu0 %v1060
        %1542 = vmatprep.subr.bf16.mxu0 %v1065
        %1543 = vmatpush1.bf16.msra.mxu0 %v1064
        %1544 = vmatprep.subr.bf16.mxu0 %v1069
        %1545 = vmatpush1.bf16.msra.mxu0 %v1068
        %1546 = vmatprep.subr.bf16.mxu0 %v1073
        %1547 = vmatpush1.bf16.msra.mxu0 %v1072
        %1548 = vmatprep.subr.bf16.mxu0 %v1077
        %1549 = vmatpush1.bf16.msra.mxu0 %v1076
        %1550 = vmatprep.subr.bf16.mxu0 %v1081
        %1551 = vmatpush1.bf16.msra.mxu0 %v1080
        %1552 = vmatprep.subr.bf16.mxu0 %v1085
        %1553 = vmatpush1.bf16.msra.mxu0 %v1084
        %1554 = vmatprep.subr.bf16.mxu0 %v1089
        %1555 = vmatpush1.bf16.msra.mxu0 %v1088
        %1556 = vmatprep.subr.bf16.mxu0 %v1093
        %1557 = vmatpush1.bf16.msra.mxu0 %v1092
        %1558 = vmatprep.subr.bf16.mxu0 %v1097
        %1559 = vmatpush1.bf16.msra.mxu0 %v1096
        %1560 = vmatprep.subr.bf16.mxu0 %v1101
        %1561 = vmatpush1.bf16.msra.mxu0 %v1100
        %1562 = vmatprep.subr.bf16.mxu0 %v1105
        %1563 = vmatpush1.bf16.msra.mxu0 %v1104
        %1564 = vmatprep.subr.bf16.mxu0 %v1109
        %1565 = vmatpush1.bf16.msra.mxu0 %v1108
        %1566 = vmatprep.subr.bf16.mxu0 %v1113
        %1567 = vmatpush1.bf16.msra.mxu0 %v1112
        %1568 = vmatprep.subr.bf16.mxu0 %v1117
        %1569 = vmatpush1.bf16.msra.mxu0 %v1116
        %1570 = vmatprep.subr.bf16.mxu0 %v1121
        %1571 = vmatpush1.bf16.msra.mxu0 %v1120
        %1572 = vmatprep.mubr.bf16.mxu0 %v611
        %1573 = vmatmul.mubr.bf16.gmra.mrb[0].mxu0 %v610
        %v1574 = vpop.f32.mrb[0].mxu0
        %v1575 = vadd.f32 0.0, %v1574
        %v1576 = vpop.f32.mrb[0].mxu0
        %v1577 = vadd.f32 0.0, %v1576
        %v1578 = vpop.f32.mrb[0].mxu0
        %v1579 = vadd.f32 0.0, %v1578
        %v1580 = vpop.f32.mrb[0].mxu0
        %v1581 = vadd.f32 0.0, %v1580
        %1582 = vmatprep.mubr.bf16.mxu0 %v615
        %1583 = vmatmul.mubr.bf16.gmra.mrb[0].mxu0 %v614
        %v1584 = vpop.f32.mrb[0].mxu0
        %v1585 = vadd.f32 0.0, %v1584
        %v1586 = vpop.f32.mrb[0].mxu0
        %v1587 = vadd.f32 0.0, %v1586
        %v1588 = vpop.f32.mrb[0].mxu0
        %v1589 = vadd.f32 0.0, %v1588
        %v1590 = vpop.f32.mrb[0].mxu0
        %v1591 = vadd.f32 0.0, %v1590
        %1592 = vmatprep.mubr.bf16.mxu0 %v619
        %1593 = vmatmul.mubr.bf16.gmra.mrb[0].mxu0 %v618
        %v1594 = vpop.f32.mrb[0].mxu0
        %v1595 = vadd.f32 0.0, %v1594
        %v1596 = vpop.f32.mrb[0].mxu0
        %v1597 = vadd.f32 0.0, %v1596
        %v1598 = vpop.f32.mrb[0].mxu0
        %v1599 = vadd.f32 0.0, %v1598
        %v1600 = vpop.f32.mrb[0].mxu0
        %v1601 = vadd.f32 0.0, %v1600
        %1602 = vmatprep.mubr.bf16.mxu0 %v623
        %1603 = vmatmul.mubr.bf16.gmra.mrb[0].mxu0 %v622
        %v1604 = vpop.f32.mrb[0].mxu0
        %v1605 = vadd.f32 0.0, %v1604
        %v1606 = vpop.f32.mrb[0].mxu0
        %v1607 = vadd.f32 0.0, %v1606
        %v1608 = vpop.f32.mrb[0].mxu0
        %v1609 = vadd.f32 0.0, %v1608
        %v1610 = vpop.f32.mrb[0].mxu0
        %v1611 = vadd.f32 0.0, %v1610
        %1612 = vmatprep.mubr.bf16.mxu0 %v627
        %1613 = vmatmul.mubr.bf16.gmra.mrb[0].mxu0 %v626
        %v1614 = vpop.f32.mrb[0].mxu0
        %v1615 = vadd.f32 0.0, %v1614
        %v1616 = vpop.f32.mrb[0].mxu0
        %v1617 = vadd.f32 0.0, %v1616
        %v1618 = vpop.f32.mrb[0].mxu0
        %v1619 = vadd.f32 0.0, %v1618
        %v1620 = vpop.f32.mrb[0].mxu0
        %v1621 = vadd.f32 0.0, %v1620
        %1622 = vmatprep.mubr.bf16.mxu0 %v631
        %1623 = vmatmul.mubr.bf16.gmra.mrb[0].mxu0 %v630
        %v1624 = vpop.f32.mrb[0].mxu0
        %v1625 = vadd.f32 0.0, %v1624
        %v1626 = vpop.f32.mrb[0].mxu0
        %v1627 = vadd.f32 0.0, %v1626
        %v1628 = vpop.f32.mrb[0].mxu0
        %v1629 = vadd.f32 0.0, %v1628
        %v1630 = vpop.f32.mrb[0].mxu0
        %v1631 = vadd.f32 0.0, %v1630
        %1632 = vmatprep.mubr.bf16.mxu0 %v635
        %1633 = vmatmul.mubr.bf16.gmra.mrb[0].mxu0 %v634
        %v1634 = vpop.f32.mrb[0].mxu0
        %v1635 = vadd.f32 0.0, %v1634
        %v1636 = vpop.f32.mrb[0].mxu0
        %v1637 = vadd.f32 0.0, %v1636
        %v1638 = vpop.f32.mrb[0].mxu0
        %v1639 = vadd.f32 0.0, %v1638
        %v1640 = vpop.f32.mrb[0].mxu0
        %v1641 = vadd.f32 0.0, %v1640
        %1642 = vmatprep.mubr.bf16.mxu0 %v639
        %1643 = vmatmul.mubr.bf16.gmra.mrb[0].mxu0 %v638
        %v1644 = vpop.f32.mrb[0].mxu0
        %v1645 = vadd.f32 0.0, %v1644
        %v1646 = vpop.f32.mrb[0].mxu0
        %v1647 = vadd.f32 0.0, %v1646
        %v1648 = vpop.f32.mrb[0].mxu0
        %v1649 = vadd.f32 0.0, %v1648
        %v1650 = vpop.f32.mrb[0].mxu0
        %v1651 = vadd.f32 0.0, %v1650
        %1652 = vdwg.mxu0
        %1653 = vmatprep.subr.bf16.mxu0 %v1125
        %1654 = vmatpush1.bf16.msra.mxu0 %v1124
        %1655 = vmatprep.subr.bf16.mxu0 %v1129
        %1656 = vmatpush1.bf16.msra.mxu0 %v1128
        %1657 = vmatprep.subr.bf16.mxu0 %v1133
        %1658 = vmatpush1.bf16.msra.mxu0 %v1132
        %1659 = vmatprep.subr.bf16.mxu0 %v1137
        %1660 = vmatpush1.bf16.msra.mxu0 %v1136
        %1661 = vmatprep.subr.bf16.mxu0 %v1141
        %1662 = vmatpush1.bf16.msra.mxu0 %v1140
        %1663 = vmatprep.subr.bf16.mxu0 %v1145
        %1664 = vmatpush1.bf16.msra.mxu0 %v1144
        %1665 = vmatprep.subr.bf16.mxu0 %v1149
        %1666 = vmatpush1.bf16.msra.mxu0 %v1148
        %1667 = vmatprep.subr.bf16.mxu0 %v1153
        %1668 = vmatpush1.bf16.msra.mxu0 %v1152
        %1669 = vmatprep.subr.bf16.mxu0 %v1157
        %1670 = vmatpush1.bf16.msra.mxu0 %v1156
        %1671 = vmatprep.subr.bf16.mxu0 %v1161
        %1672 = vmatpush1.bf16.msra.mxu0 %v1160
        %1673 = vmatprep.subr.bf16.mxu0 %v1165
        %1674 = vmatpush1.bf16.msra.mxu0 %v1164
        %1675 = vmatprep.subr.bf16.mxu0 %v1169
        %1676 = vmatpush1.bf16.msra.mxu0 %v1168
        %1677 = vmatprep.subr.bf16.mxu0 %v1173
        %1678 = vmatpush1.bf16.msra.mxu0 %v1172
        %1679 = vmatprep.subr.bf16.mxu0 %v1177
        %1680 = vmatpush1.bf16.msra.mxu0 %v1176
        %1681 = vmatprep.subr.bf16.mxu0 %v1181
        %1682 = vmatpush1.bf16.msra.mxu0 %v1180
        %1683 = vmatprep.subr.bf16.mxu0 %v1185
        %1684 = vmatpush1.bf16.msra.mxu0 %v1184
        %1685 = vmatprep.mubr.bf16.mxu0 %v613
        %1686 = vmatmul.mubr.bf16.gmra.mrb[0].mxu0 %v612
        %v1687 = vpop.f32.mrb[0].mxu0
        %v1688 = vadd.f32 %v1575, %v1687
        %v1689 = vpop.f32.mrb[0].mxu0
        %v1690 = vadd.f32 %v1577, %v1689
        %v1691 = vpop.f32.mrb[0].mxu0
        %v1692 = vadd.f32 %v1579, %v1691
        %v1693 = vpop.f32.mrb[0].mxu0
        %v1694 = vadd.f32 %v1581, %v1693
        %1695 = vmatprep.mubr.bf16.mxu0 %v617
        %1696 = vmatmul.mubr.bf16.gmra.mrb[0].mxu0 %v616
        %v1697 = vpop.f32.mrb[0].mxu0
        %v1698 = vadd.f32 %v1585, %v1697
        %v1699 = vpop.f32.mrb[0].mxu0
        %v1700 = vadd.f32 %v1587, %v1699
        %v1701 = vpop.f32.mrb[0].mxu0
        %v1702 = vadd.f32 %v1589, %v1701
        %v1703 = vpop.f32.mrb[0].mxu0
        %v1704 = vadd.f32 %v1591, %v1703
        %1705 = vmatprep.mubr.bf16.mxu0 %v621
        %1706 = vmatmul.mubr.bf16.gmra.mrb[0].mxu0 %v620
        %v1707 = vpop.f32.mrb[0].mxu0
        %v1708 = vadd.f32 %v1595, %v1707
        %v1709 = vpop.f32.mrb[0].mxu0
        %v1710 = vadd.f32 %v1597, %v1709
        %v1711 = vpop.f32.mrb[0].mxu0
        %v1712 = vadd.f32 %v1599, %v1711
        %v1713 = vpop.f32.mrb[0].mxu0
        %v1714 = vadd.f32 %v1601, %v1713
        %1715 = vmatprep.mubr.bf16.mxu0 %v625
        %1716 = vmatmul.mubr.bf16.gmra.mrb[0].mxu0 %v624
        %v1717 = vpop.f32.mrb[0].mxu0
        %v1718 = vadd.f32 %v1605, %v1717
        %v1719 = vpop.f32.mrb[0].mxu0
        %v1720 = vadd.f32 %v1607, %v1719
        %v1721 = vpop.f32.mrb[0].mxu0
        %v1722 = vadd.f32 %v1609, %v1721
        %v1723 = vpop.f32.mrb[0].mxu0
        %v1724 = vadd.f32 %v1611, %v1723
        %1725 = vmatprep.mubr.bf16.mxu0 %v629
        %1726 = vmatmul.mubr.bf16.gmra.mrb[0].mxu0 %v628
        %v1727 = vpop.f32.mrb[0].mxu0
        %v1728 = vadd.f32 %v1615, %v1727
        %v1729 = vpop.f32.mrb[0].mxu0
        %v1730 = vadd.f32 %v1617, %v1729
        %v1731 = vpop.f32.mrb[0].mxu0
        %v1732 = vadd.f32 %v1619, %v1731
        %v1733 = vpop.f32.mrb[0].mxu0
        %v1734 = vadd.f32 %v1621, %v1733
        %1735 = vmatprep.mubr.bf16.mxu0 %v633
        %1736 = vmatmul.mubr.bf16.gmra.mrb[0].mxu0 %v632
        %v1737 = vpop.f32.mrb[0].mxu0
        %v1738 = vadd.f32 %v1625, %v1737
        %v1739 = vpop.f32.mrb[0].mxu0
        %v1740 = vadd.f32 %v1627, %v1739
        %v1741 = vpop.f32.mrb[0].mxu0
        %v1742 = vadd.f32 %v1629, %v1741
        %v1743 = vpop.f32.mrb[0].mxu0
        %v1744 = vadd.f32 %v1631, %v1743
        %1745 = vmatprep.mubr.bf16.mxu0 %v637
        %1746 = vmatmul.mubr.bf16.gmra.mrb[0].mxu0 %v636
        %v1747 = vpop.f32.mrb[0].mxu0
        %v1748 = vadd.f32 %v1635, %v1747
        %v1749 = vpop.f32.mrb[0].mxu0
        %v1750 = vadd.f32 %v1637, %v1749
        %v1751 = vpop.f32.mrb[0].mxu0
        %v1752 = vadd.f32 %v1639, %v1751
        %v1753 = vpop.f32.mrb[0].mxu0
        %v1754 = vadd.f32 %v1641, %v1753
        %1755 = vmatprep.mubr.bf16.mxu0 %v641
        %1756 = vmatmul.mubr.bf16.gmra.mrb[0].mxu0 %v640
        %v1757 = vpop.f32.mrb[0].mxu0
        %v1758 = vadd.f32 %v1645, %v1757
        %v1759 = vpop.f32.mrb[0].mxu0
        %v1760 = vadd.f32 %v1647, %v1759
        %v1761 = vpop.f32.mrb[0].mxu0
        %v1762 = vadd.f32 %v1649, %v1761
        %v1763 = vpop.f32.mrb[0].mxu0
        %v1764 = vadd.f32 %v1651, %v1763
        %1765 = vdwg.mxu0
        %v1766 = vadd.f32 %v290, %v1462
        %v1767 = vadd.f32 %v291, %v1464
        %v1768 = vadd.f32 %v292, %v1688
        %v1769 = vadd.f32 %v293, %v1690
        %v1770 = vadd.f32 %v294, %v1466
        %v1771 = vadd.f32 %v295, %v1468
        %v1772 = vadd.f32 %v296, %v1692
        %v1773 = vadd.f32 %v297, %v1694
        %v1774 = vadd.f32 %v298, %v1472
        %v1775 = vadd.f32 %v299, %v1474
        %v1776 = vadd.f32 %v300, %v1698
        %v1777 = vadd.f32 %v301, %v1700
        %v1778 = vadd.f32 %v302, %v1476
        %v1779 = vadd.f32 %v303, %v1478
        %v1780 = vadd.f32 %v304, %v1702
        %v1781 = vadd.f32 %v305, %v1704
        %v1782 = vadd.f32 %v306, %v1482
        %v1783 = vadd.f32 %v307, %v1484
        %v1784 = vadd.f32 %v308, %v1708
        %v1785 = vadd.f32 %v309, %v1710
        %v1786 = vadd.f32 %v310, %v1486
        %v1787 = vadd.f32 %v311, %v1488
        %v1788 = vadd.f32 %v312, %v1712
        %v1789 = vadd.f32 %v313, %v1714
        %v1790 = vadd.f32 %v314, %v1492
        %v1791 = vadd.f32 %v315, %v1494
        %v1792 = vadd.f32 %v316, %v1718
        %v1793 = vadd.f32 %v317, %v1720
        %v1794 = vadd.f32 %v318, %v1496
        %v1795 = vadd.f32 %v319, %v1498
        %v1796 = vadd.f32 %v320, %v1722
        %v1797 = vadd.f32 %v321, %v1724
        %v1798 = vadd.f32 %v322, %v1502
        %v1799 = vadd.f32 %v323, %v1504
        %v1800 = vadd.f32 %v324, %v1728
        %v1801 = vadd.f32 %v325, %v1730
        %v1802 = vadd.f32 %v326, %v1506
        %v1803 = vadd.f32 %v327, %v1508
        %v1804 = vadd.f32 %v328, %v1732
        %v1805 = vadd.f32 %v329, %v1734
        %v1806 = vadd.f32 %v330, %v1512
        %v1807 = vadd.f32 %v331, %v1514
        %v1808 = vadd.f32 %v332, %v1738
        %v1809 = vadd.f32 %v333, %v1740
        %v1810 = vadd.f32 %v334, %v1516
        %v1811 = vadd.f32 %v335, %v1518
        %v1812 = vadd.f32 %v336, %v1742
        %v1813 = vadd.f32 %v337, %v1744
        %v1814 = vadd.f32 %v338, %v1522
        %v1815 = vadd.f32 %v339, %v1524
        %v1816 = vadd.f32 %v340, %v1748
        %v1817 = vadd.f32 %v341, %v1750
        %v1818 = vadd.f32 %v342, %v1526
        %v1819 = vadd.f32 %v343, %v1528
        %v1820 = vadd.f32 %v344, %v1752
        %v1821 = vadd.f32 %v345, %v1754
        %v1822 = vadd.f32 %v346, %v1532
        %v1823 = vadd.f32 %v347, %v1534
        %v1824 = vadd.f32 %v348, %v1758
        %v1825 = vadd.f32 %v349, %v1760
        %v1826 = vadd.f32 %v350, %v1536
        %v1827 = vadd.f32 %v351, %v1538
        %v1828 = vadd.f32 %v352, %v1762
        %v1829 = vadd.f32 %v353, %v1764
        %1830 = vst [vmem:[#allocation2] sm:$0xff] %v1766
        %1831 = vst [vmem:[#allocation2 + $0x8] sm:$0xff] %v1767
        %1832 = vst [vmem:[#allocation2 + $0x10] sm:$0xff] %v1768
        %1833 = vst [vmem:[#allocation2 + $0x18] sm:$0xff] %v1769
        %1834 = vst [vmem:[#allocation2 + $0x20] sm:$0xff] %v1770
        %1835 = vst [vmem:[#allocation2 + $0x28] sm:$0xff] %v1771
        %1836 = vst [vmem:[#allocation2 + $0x30] sm:$0xff] %v1772
        %1837 = vst [vmem:[#allocation2 + $0x38] sm:$0xff] %v1773
        %1838 = vst [vmem:[#allocation2 + $0x40] sm:$0xff] %v1774
        %1839 = vst [vmem:[#allocation2 + $0x48] sm:$0xff] %v1775
        %1840 = vst [vmem:[#allocation2 + $0x50] sm:$0xff] %v1776
        %1841 = vst [vmem:[#allocation2 + $0x58] sm:$0xff] %v1777
        %1842 = vst [vmem:[#allocation2 + $0x60] sm:$0xff] %v1778
        %1843 = vst [vmem:[#allocation2 + $0x68] sm:$0xff] %v1779
        %1844 = vst [vmem:[#allocation2 + $0x70] sm:$0xff] %v1780
        %1845 = vst [vmem:[#allocation2 + $0x78] sm:$0xff] %v1781
        %1846 = vst [vmem:[#allocation2 + $0x80] sm:$0xff] %v1782
        %1847 = vst [vmem:[#allocation2 + $0x88] sm:$0xff] %v1783
        %1848 = vst [vmem:[#allocation2 + $0x90] sm:$0xff] %v1784
        %1849 = vst [vmem:[#allocation2 + $0x98] sm:$0xff] %v1785
        %1850 = vst [vmem:[#allocation2 + $0xa0] sm:$0xff] %v1786
        %1851 = vst [vmem:[#allocation2 + $0xa8] sm:$0xff] %v1787
        %1852 = vst [vmem:[#allocation2 + $0xb0] sm:$0xff] %v1788
        %1853 = vst [vmem:[#allocation2 + $0xb8] sm:$0xff] %v1789
        %1854 = vst [vmem:[#allocation2 + $0xc0] sm:$0xff] %v1790
        %1855 = vst [vmem:[#allocation2 + $0xc8] sm:$0xff] %v1791
        %1856 = vst [vmem:[#allocation2 + $0xd0] sm:$0xff] %v1792
        %1857 = vst [vmem:[#allocation2 + $0xd8] sm:$0xff] %v1793
        %1858 = vst [vmem:[#allocation2 + $0xe0] sm:$0xff] %v1794
        %1859 = vst [vmem:[#allocation2 + $0xe8] sm:$0xff] %v1795
        %1860 = vst [vmem:[#allocation2 + $0xf0] sm:$0xff] %v1796
        %1861 = vst [vmem:[#allocation2 + $0xf8] sm:$0xff] %v1797
        %1862 = vst [vmem:[#allocation2 + $0x100] sm:$0xff] %v1798
        %1863 = vst [vmem:[#allocation2 + $0x108] sm:$0xff] %v1799
        %1864 = vst [vmem:[#allocation2 + $0x110] sm:$0xff] %v1800
        %1865 = vst [vmem:[#allocation2 + $0x118] sm:$0xff] %v1801
        %1866 = vst [vmem:[#allocation2 + $0x120] sm:$0xff] %v1802
        %1867 = vst [vmem:[#allocation2 + $0x128] sm:$0xff] %v1803
        %1868 = vst [vmem:[#allocation2 + $0x130] sm:$0xff] %v1804
        %1869 = vst [vmem:[#allocation2 + $0x138] sm:$0xff] %v1805
        %1870 = vst [vmem:[#allocation2 + $0x140] sm:$0xff] %v1806
        %1871 = vst [vmem:[#allocation2 + $0x148] sm:$0xff] %v1807
        %1872 = vst [vmem:[#allocation2 + $0x150] sm:$0xff] %v1808
        %1873 = vst [vmem:[#allocation2 + $0x158] sm:$0xff] %v1809
        %1874 = vst [vmem:[#allocation2 + $0x160] sm:$0xff] %v1810
        %1875 = vst [vmem:[#allocation2 + $0x168] sm:$0xff] %v1811
        %1876 = vst [vmem:[#allocation2 + $0x170] sm:$0xff] %v1812
        %1877 = vst [vmem:[#allocation2 + $0x178] sm:$0xff] %v1813
        %1878 = vst [vmem:[#allocation2 + $0x180] sm:$0xff] %v1814
        %1879 = vst [vmem:[#allocation2 + $0x188] sm:$0xff] %v1815
        %1880 = vst [vmem:[#allocation2 + $0x190] sm:$0xff] %v1816
        %1881 = vst [vmem:[#allocation2 + $0x198] sm:$0xff] %v1817
        %1882 = vst [vmem:[#allocation2 + $0x1a0] sm:$0xff] %v1818
        %1883 = vst [vmem:[#allocation2 + $0x1a8] sm:$0xff] %v1819
        %1884 = vst [vmem:[#allocation2 + $0x1b0] sm:$0xff] %v1820
        %1885 = vst [vmem:[#allocation2 + $0x1b8] sm:$0xff] %v1821
        %1886 = vst [vmem:[#allocation2 + $0x1c0] sm:$0xff] %v1822
        %1887 = vst [vmem:[#allocation2 + $0x1c8] sm:$0xff] %v1823
        %1888 = vst [vmem:[#allocation2 + $0x1d0] sm:$0xff] %v1824
        %1889 = vst [vmem:[#allocation2 + $0x1d8] sm:$0xff] %v1825
        %1890 = vst [vmem:[#allocation2 + $0x1e0] sm:$0xff] %v1826
        %1891 = vst [vmem:[#allocation2 + $0x1e8] sm:$0xff] %v1827
        %1892 = vst [vmem:[#allocation2 + $0x1f0] sm:$0xff] %v1828
        %1893 = vst [vmem:[#allocation2 + $0x1f8] sm:$0xff] %v1829
        // Predicated region
        $region41: #{tpu_custom_call.1} parent=27 // pred_check
          %p1894 = pneg %p222
        $region42: #{tpu_custom_call.1} parent=27 // pred_check_branch
          %1896 = sbr.rel (%p1894) target = $region44
        $region43: #{tpu_custom_call.1} parent=27 // pred_region
          %v1897 = vld [vmem:[#allocation2] sm:$0xff]
          %v1898 = vld [vmem:[#allocation2 + $0x8] sm:$0xff]
          %v1899 = vld [vmem:[#allocation2 + $0x10] sm:$0xff]
          %v1900 = vld [vmem:[#allocation2 + $0x18] sm:$0xff]
          %v1901 = vld [vmem:[#allocation2 + $0x20] sm:$0xff]
          %v1902 = vld [vmem:[#allocation2 + $0x28] sm:$0xff]
          %v1903 = vld [vmem:[#allocation2 + $0x30] sm:$0xff]
          %v1904 = vld [vmem:[#allocation2 + $0x38] sm:$0xff]
          %v1905 = vld [vmem:[#allocation2 + $0x40] sm:$0xff]
          %v1906 = vld [vmem:[#allocation2 + $0x48] sm:$0xff]
          %v1907 = vld [vmem:[#allocation2 + $0x50] sm:$0xff]
          %v1908 = vld [vmem:[#allocation2 + $0x58] sm:$0xff]
          %v1909 = vld [vmem:[#allocation2 + $0x60] sm:$0xff]
          %v1910 = vld [vmem:[#allocation2 + $0x68] sm:$0xff]
          %v1911 = vld [vmem:[#allocation2 + $0x70] sm:$0xff]
          %v1912 = vld [vmem:[#allocation2 + $0x78] sm:$0xff]
          %v1913 = vld [vmem:[#allocation2 + $0x80] sm:$0xff]
          %v1914 = vld [vmem:[#allocation2 + $0x88] sm:$0xff]
          %v1915 = vld [vmem:[#allocation2 + $0x90] sm:$0xff]
          %v1916 = vld [vmem:[#allocation2 + $0x98] sm:$0xff]
          %v1917 = vld [vmem:[#allocation2 + $0xa0] sm:$0xff]
          %v1918 = vld [vmem:[#allocation2 + $0xa8] sm:$0xff]
          %v1919 = vld [vmem:[#allocation2 + $0xb0] sm:$0xff]
          %v1920 = vld [vmem:[#allocation2 + $0xb8] sm:$0xff]
          %v1921 = vld [vmem:[#allocation2 + $0xc0] sm:$0xff]
          %v1922 = vld [vmem:[#allocation2 + $0xc8] sm:$0xff]
          %v1923 = vld [vmem:[#allocation2 + $0xd0] sm:$0xff]
          %v1924 = vld [vmem:[#allocation2 + $0xd8] sm:$0xff]
          %v1925 = vld [vmem:[#allocation2 + $0xe0] sm:$0xff]
          %v1926 = vld [vmem:[#allocation2 + $0xe8] sm:$0xff]
          %v1927 = vld [vmem:[#allocation2 + $0xf0] sm:$0xff]
          %v1928 = vld [vmem:[#allocation2 + $0xf8] sm:$0xff]
          %v1929 = vld [vmem:[#allocation2 + $0x100] sm:$0xff]
          %v1930 = vld [vmem:[#allocation2 + $0x108] sm:$0xff]
          %v1931 = vld [vmem:[#allocation2 + $0x110] sm:$0xff]
          %v1932 = vld [vmem:[#allocation2 + $0x118] sm:$0xff]
          %v1933 = vld [vmem:[#allocation2 + $0x120] sm:$0xff]
          %v1934 = vld [vmem:[#allocation2 + $0x128] sm:$0xff]
          %v1935 = vld [vmem:[#allocation2 + $0x130] sm:$0xff]
          %v1936 = vld [vmem:[#allocation2 + $0x138] sm:$0xff]
          %v1937 = vld [vmem:[#allocation2 + $0x140] sm:$0xff]
          %v1938 = vld [vmem:[#allocation2 + $0x148] sm:$0xff]
          %v1939 = vld [vmem:[#allocation2 + $0x150] sm:$0xff]
          %v1940 = vld [vmem:[#allocation2 + $0x158] sm:$0xff]
          %v1941 = vld [vmem:[#allocation2 + $0x160] sm:$0xff]
          %v1942 = vld [vmem:[#allocation2 + $0x168] sm:$0xff]
          %v1943 = vld [vmem:[#allocation2 + $0x170] sm:$0xff]
          %v1944 = vld [vmem:[#allocation2 + $0x178] sm:$0xff]
          %v1945 = vld [vmem:[#allocation2 + $0x180] sm:$0xff]
          %v1946 = vld [vmem:[#allocation2 + $0x188] sm:$0xff]
          %v1947 = vld [vmem:[#allocation2 + $0x190] sm:$0xff]
          %v1948 = vld [vmem:[#allocation2 + $0x198] sm:$0xff]
          %v1949 = vld [vmem:[#allocation2 + $0x1a0] sm:$0xff]
          %v1950 = vld [vmem:[#allocation2 + $0x1a8] sm:$0xff]
          %v1951 = vld [vmem:[#allocation2 + $0x1b0] sm:$0xff]
          %v1952 = vld [vmem:[#allocation2 + $0x1b8] sm:$0xff]
          %v1953 = vld [vmem:[#allocation2 + $0x1c0] sm:$0xff]
          %v1954 = vld [vmem:[#allocation2 + $0x1c8] sm:$0xff]
          %v1955 = vld [vmem:[#allocation2 + $0x1d0] sm:$0xff]
          %v1956 = vld [vmem:[#allocation2 + $0x1d8] sm:$0xff]
          %v1957 = vld [vmem:[#allocation2 + $0x1e0] sm:$0xff]
          %v1958 = vld [vmem:[#allocation2 + $0x1e8] sm:$0xff]
          %v1959 = vld [vmem:[#allocation2 + $0x1f0] sm:$0xff]
          %v1960 = vld [vmem:[#allocation2 + $0x1f8] sm:$0xff]
          %v1961 = vpack.c.bf16 %v1901, %v1897
          %v1962 = vpack.c.bf16 %v1902, %v1898
          %v1963 = vpack.c.bf16 %v1903, %v1899
          %v1964 = vpack.c.bf16 %v1904, %v1900
          %v1965 = vpack.c.bf16 %v1909, %v1905
          %v1966 = vpack.c.bf16 %v1910, %v1906
          %v1967 = vpack.c.bf16 %v1911, %v1907
          %v1968 = vpack.c.bf16 %v1912, %v1908
          %v1969 = vpack.c.bf16 %v1917, %v1913
          %v1970 = vpack.c.bf16 %v1918, %v1914
          %v1971 = vpack.c.bf16 %v1919, %v1915
          %v1972 = vpack.c.bf16 %v1920, %v1916
          %v1973 = vpack.c.bf16 %v1925, %v1921
          %v1974 = vpack.c.bf16 %v1926, %v1922
          %v1975 = vpack.c.bf16 %v1927, %v1923
          %v1976 = vpack.c.bf16 %v1928, %v1924
          %v1977 = vpack.c.bf16 %v1933, %v1929
          %v1978 = vpack.c.bf16 %v1934, %v1930
          %v1979 = vpack.c.bf16 %v1935, %v1931
          %v1980 = vpack.c.bf16 %v1936, %v1932
          %v1981 = vpack.c.bf16 %v1941, %v1937
          %v1982 = vpack.c.bf16 %v1942, %v1938
          %v1983 = vpack.c.bf16 %v1943, %v1939
          %v1984 = vpack.c.bf16 %v1944, %v1940
          %v1985 = vpack.c.bf16 %v1949, %v1945
          %v1986 = vpack.c.bf16 %v1950, %v1946
          %v1987 = vpack.c.bf16 %v1951, %v1947
          %v1988 = vpack.c.bf16 %v1952, %v1948
          %v1989 = vpack.c.bf16 %v1957, %v1953
          %v1990 = vpack.c.bf16 %v1958, %v1954
          %v1991 = vpack.c.bf16 %v1959, %v1955
          %v1992 = vpack.c.bf16 %v1960, %v1956
          %v2025 = vunpack.c.l.b16 %v1961
          %v2026 = vunpack.c.l.b16 %v1962
          %v2027 = vunpack.c.l.b16 %v1963
          %v2028 = vunpack.c.l.b16 %v1964
          %v2029 = vunpack.c.h.b16 %v1961
          %v2030 = vunpack.c.h.b16 %v1962
          %v2031 = vunpack.c.h.b16 %v1963
          %v2032 = vunpack.c.h.b16 %v1964
          %v2033 = vunpack.c.l.b16 %v1965
          %v2034 = vunpack.c.l.b16 %v1966
          %v2035 = vunpack.c.l.b16 %v1967
          %v2036 = vunpack.c.l.b16 %v1968
          %v2037 = vunpack.c.h.b16 %v1965
          %v2038 = vunpack.c.h.b16 %v1966
          %v2039 = vunpack.c.h.b16 %v1967
          %v2040 = vunpack.c.h.b16 %v1968
          %v2041 = vunpack.c.l.b16 %v1969
          %v2042 = vunpack.c.l.b16 %v1970
          %v2043 = vunpack.c.l.b16 %v1971
          %v2044 = vunpack.c.l.b16 %v1972
          %v2045 = vunpack.c.h.b16 %v1969
          %v2046 = vunpack.c.h.b16 %v1970
          %v2047 = vunpack.c.h.b16 %v1971
          %v2048 = vunpack.c.h.b16 %v1972
          %v2049 = vunpack.c.l.b16 %v1973
          %v2050 = vunpack.c.l.b16 %v1974
          %v2051 = vunpack.c.l.b16 %v1975
          %v2052 = vunpack.c.l.b16 %v1976
          %v2053 = vunpack.c.h.b16 %v1973
          %v2054 = vunpack.c.h.b16 %v1974
          %v2055 = vunpack.c.h.b16 %v1975
          %v2056 = vunpack.c.h.b16 %v1976
          %v2057 = vunpack.c.l.b16 %v1977
          %v2058 = vunpack.c.l.b16 %v1978
          %v2059 = vunpack.c.l.b16 %v1979
          %v2060 = vunpack.c.l.b16 %v1980
          %v2061 = vunpack.c.h.b16 %v1977
          %v2062 = vunpack.c.h.b16 %v1978
          %v2063 = vunpack.c.h.b16 %v1979
          %v2064 = vunpack.c.h.b16 %v1980
          %v2065 = vunpack.c.l.b16 %v1981
          %v2066 = vunpack.c.l.b16 %v1982
          %v2067 = vunpack.c.l.b16 %v1983
          %v2068 = vunpack.c.l.b16 %v1984
          %v2069 = vunpack.c.h.b16 %v1981
          %v2070 = vunpack.c.h.b16 %v1982
          %v2071 = vunpack.c.h.b16 %v1983
          %v2072 = vunpack.c.h.b16 %v1984
          %v2073 = vunpack.c.l.b16 %v1985
          %v2074 = vunpack.c.l.b16 %v1986
          %v2075 = vunpack.c.l.b16 %v1987
          %v2076 = vunpack.c.l.b16 %v1988
          %v2077 = vunpack.c.h.b16 %v1985
          %v2078 = vunpack.c.h.b16 %v1986
          %v2079 = vunpack.c.h.b16 %v1987
          %v2080 = vunpack.c.h.b16 %v1988
          %v2081 = vunpack.c.l.b16 %v1989
          %v2082 = vunpack.c.l.b16 %v1990
          %v2083 = vunpack.c.l.b16 %v1991
          %v2084 = vunpack.c.l.b16 %v1992
          %v2085 = vunpack.c.h.b16 %v1989
          %v2086 = vunpack.c.h.b16 %v1990
          %v2087 = vunpack.c.h.b16 %v1991
          %v2088 = vunpack.c.h.b16 %v1992
          %v2089 = vpack.c.b16 %v2026, %v2025
          %v2090 = vpack.c.b16 %v2028, %v2027
          %v2091 = vpack.c.b16 %v2030, %v2029
          %v2092 = vpack.c.b16 %v2032, %v2031
          %v2093 = vpack.c.b16 %v2034, %v2033
          %v2094 = vpack.c.b16 %v2036, %v2035
          %v2095 = vpack.c.b16 %v2038, %v2037
          %v2096 = vpack.c.b16 %v2040, %v2039
          %v2097 = vpack.c.b16 %v2042, %v2041
          %v2098 = vpack.c.b16 %v2044, %v2043
          %v2099 = vpack.c.b16 %v2046, %v2045
          %v2100 = vpack.c.b16 %v2048, %v2047
          %v2101 = vpack.c.b16 %v2050, %v2049
          %v2102 = vpack.c.b16 %v2052, %v2051
          %v2103 = vpack.c.b16 %v2054, %v2053
          %v2104 = vpack.c.b16 %v2056, %v2055
          %v2105 = vpack.c.b16 %v2058, %v2057
          %v2106 = vpack.c.b16 %v2060, %v2059
          %v2107 = vpack.c.b16 %v2062, %v2061
          %v2108 = vpack.c.b16 %v2064, %v2063
          %v2109 = vpack.c.b16 %v2066, %v2065
          %v2110 = vpack.c.b16 %v2068, %v2067
          %v2111 = vpack.c.b16 %v2070, %v2069
          %v2112 = vpack.c.b16 %v2072, %v2071
          %v2113 = vpack.c.b16 %v2074, %v2073
          %v2114 = vpack.c.b16 %v2076, %v2075
          %v2115 = vpack.c.b16 %v2078, %v2077
          %v2116 = vpack.c.b16 %v2080, %v2079
          %v2117 = vpack.c.b16 %v2082, %v2081
          %v2118 = vpack.c.b16 %v2084, %v2083
          %v2119 = vpack.c.b16 %v2086, %v2085
          %v2120 = vpack.c.b16 %v2088, %v2087
          %2153 = vst [vmem:[%s215] sm:$0xff] %v2089
          %2154 = vst [vmem:[%s215 + $0x8] sm:$0xff] %v2090
          %2155 = vst [vmem:[%s215 + $0x10] sm:$0xff] %v2091
          %2156 = vst [vmem:[%s215 + $0x18] sm:$0xff] %v2092
          %2157 = vst [vmem:[%s215 + $0x20] sm:$0xff] %v2093
          %2158 = vst [vmem:[%s215 + $0x28] sm:$0xff] %v2094
          %2159 = vst [vmem:[%s215 + $0x30] sm:$0xff] %v2095
          %2160 = vst [vmem:[%s215 + $0x38] sm:$0xff] %v2096
          %2161 = vst [vmem:[%s215 + $0x40] sm:$0xff] %v2097
          %2162 = vst [vmem:[%s215 + $0x48] sm:$0xff] %v2098
          %2163 = vst [vmem:[%s215 + $0x50] sm:$0xff] %v2099
          %2164 = vst [vmem:[%s215 + $0x58] sm:$0xff] %v2100
          %2165 = vst [vmem:[%s215 + $0x60] sm:$0xff] %v2101
          %2166 = vst [vmem:[%s215 + $0x68] sm:$0xff] %v2102
          %2167 = vst [vmem:[%s215 + $0x70] sm:$0xff] %v2103
          %2168 = vst [vmem:[%s215 + $0x78] sm:$0xff] %v2104
          %2169 = vst [vmem:[%s215 + $0x80] sm:$0xff] %v2105
          %2170 = vst [vmem:[%s215 + $0x88] sm:$0xff] %v2106
          %2171 = vst [vmem:[%s215 + $0x90] sm:$0xff] %v2107
          %2172 = vst [vmem:[%s215 + $0x98] sm:$0xff] %v2108
          %2173 = vst [vmem:[%s215 + $0xa0] sm:$0xff] %v2109
          %2174 = vst [vmem:[%s215 + $0xa8] sm:$0xff] %v2110
          %2175 = vst [vmem:[%s215 + $0xb0] sm:$0xff] %v2111
          %2176 = vst [vmem:[%s215 + $0xb8] sm:$0xff] %v2112
          %2177 = vst [vmem:[%s215 + $0xc0] sm:$0xff] %v2113
          %2178 = vst [vmem:[%s215 + $0xc8] sm:$0xff] %v2114
          %2179 = vst [vmem:[%s215 + $0xd0] sm:$0xff] %v2115
          %2180 = vst [vmem:[%s215 + $0xd8] sm:$0xff] %v2116
          %2181 = vst [vmem:[%s215 + $0xe0] sm:$0xff] %v2117
          %2182 = vst [vmem:[%s215 + $0xe8] sm:$0xff] %v2118
          %2183 = vst [vmem:[%s215 + $0xf0] sm:$0xff] %v2119
          %2184 = vst [vmem:[%s215 + $0xf8] sm:$0xff] %v2120
        $region44: #{tpu_custom_call.1} parent=27 // pred_fallthru
          _
        %s2185 = sand.u32 %s105, 1
        %s2186 = scalar_lea.sflag [#allocation5], %s2185
        %s2187 = sand.u32 %s105, 1
        %s2188 = smul.addr %s2187, 256
        %s2189 = scalar_lea.vmem [#allocation8], %s2188
        // Predicated region
        $region45: #{tpu_custom_call.1} parent=27 // pred_check
          %p2190 = pneg %p115
        $region46: #{tpu_custom_call.1} parent=27 // pred_check_branch
          %2192 = sbr.rel (%p2190) target = $region48
        $region47: #{tpu_custom_call.1} parent=27 // pred_region
          %s2193 = smul.u32 16, %s25
          %s2194 = smul.u32 4, %s26
          %s2196 = ssub.s32 4096, 4096
          %2197 = vsyncadd %s2186, %s2196
          %s2198 = smul.addr %s2193, 8
          %s2199 = sadd.s32 %s2194, %s2198
          %s2200 = smul.addr %s2199, 64
          %s2201 = scalar_lea.hbm %s2, %s2200
          %s2202 = sshll.u32 %s2189, 4
          %s2203 = int_to_ptr.vmem [resolvable:$true] %s2202
          %2208 = dma.vmem_to_hbm [thread:$0]  %s2203, 4096, %s2201, %s2186, 256, 512, 16
        $region48: #{tpu_custom_call.1} parent=27 // pred_fallthru
          _
      $region28: #{tpu_custom_call.1} parent=5 // pred_fallthru
        _
      %p2209 = scmp.le.s32.totalorder 2, %s15
      // Predicated region
      $region49: #{tpu_custom_call.1} parent=5 // pred_check
        %p2210 = pneg %p2209
      $region50: #{tpu_custom_call.1} parent=5 // pred_check_branch
        %2212 = sbr.rel (%p2210) target = $region52
      $region51: #{tpu_custom_call.1} parent=5 // pred_region
        %s2213 = ssub.s32 %s15, 2
        // Predicated region
        $region53: #{tpu_custom_call.1} parent=51 // pred_check
          %p2214 = pneg %p121
        $region54: #{tpu_custom_call.1} parent=51 // pred_check_branch
          %2216 = sbr.rel (%p2214) target = $region56
        $region55: #{tpu_custom_call.1} parent=51 // pred_region
          %s2217 = sand.u32 %s106, 1
          %s2218 = scalar_lea.sflag [#allocation5], %s2217
          %s2219 = sand.u32 %s106, 1
          %s2220 = smul.addr %s2219, 256
          %s2221 = scalar_lea.vmem [#allocation8], %s2220
          %2222 = dma.done %s2218, 4096
        $region56: #{tpu_custom_call.1} parent=51 // pred_fallthru
          _
      $region52: #{tpu_custom_call.1} parent=5 // pred_fallthru
        _
    $region6: #{tpu_custom_call.1} parent=1 // loop_footer
      %s19 = sadd.s32 1, %s15
    $region7: #{tpu_custom_call.1} parent=1 // loop_footer_branch
      %14 = sbr.rel target = $region3
    $region8: #{tpu_custom_call.1} parent=1 // loop_exit
      _
    %2223 = vsyncpa [#allocation4], 1
    %s2224 = scalar_lea.sflag [#allocation4], 1
    %2225 = vsyncpa %s2224, 1
    %2226 = vsyncpa [#allocation7], 1
    %s2227 = scalar_lea.sflag [#allocation7], 1
    %2228 = vsyncpa %s2227, 1
    %2229 = vsyncpa [#allocation5], 1
    %s2230 = scalar_lea.sflag [#allocation5], 1
    %2231 = vsyncpa %s2230, 1

</llo_original>
